<compile_context>
chip_gen: v7x
topology: tpu7x:2x2x1
jax: 0.10.0
libtpu: 0.0.40
codegen_flags: <defaults>
</compile_context>

<pallas_src>
import jax
import jax.numpy as jnp
from jax.experimental import pallas as pl
from jax.experimental.pallas import tpu as pltpu

IN_FEATURES = 3 * 32 * 32   # 3072
OUT_FEATURES = 10
N_PAD = 128                 # pad output/bias/weight cols 10 -> 128 (lane-dense)
TB_MAX = 1024               # max batch tile: 12 MiB/x-buffer f32 (x2 double-buffered)


def _round_up(x, m):
    return ((x + m - 1) // m) * m


def _choose_tb(B):
    """Batch tile: full batch for small B; otherwise a multiple of 8 that gives
    the grid >= 4 steps (so v7x's two TensorCores both get work), capped at TB_MAX."""
    if B <= 256:
        return B                        # block == full dim is always legal
    return min(TB_MAX, _round_up(pl.cdiv(B, 4), 8))


def linear_kernel(x_ref, w_ref, b_ref, o_ref):
    # x_ref: (TB, K) f32, w_ref: (K, N_PAD) f32, b_ref: (1, N_PAD) f32
    # MXU-native (TB,K)@(K,N) matmul, f32 accumulate, broadcast bias add,
    # lane-dense (TB, 128) store.
    acc = jnp.dot(x_ref[...], w_ref[...], preferred_element_type=jnp.float32)
    o_ref[...] = (acc + b_ref[...]).astype(o_ref.dtype)


def prepare_linear_params(weight, bias):
    """One-time parameter prep (do NOT call per forward):
    pad 10 -> 128 output channels and pre-transpose the weight to (K, 128)."""
    pdt = weight.dtype
    w_pad_t = (
        jnp.zeros((IN_FEATURES, N_PAD), dtype=pdt)
        .at[:, :OUT_FEATURES].set(weight.T)
    )
    b_pad = jnp.zeros((1, N_PAD), dtype=pdt).at[0, :OUT_FEATURES].set(bias)
    return w_pad_t, b_pad


def linear_cifar10_forward(x_nchw, w_pad_t, b_pad):
    """x_nchw: (B, 3, 32, 32); w_pad_t: (3072, 128); b_pad: (1, 128).
    Returns (B, 10), matching torch.nn.Linear(3*32*32, 10) on x.view(-1, 3072)."""
    B = x_nchw.shape[0]
    dtype = x_nchw.dtype

    # Glue (plain JAX): flatten like torch .view(-1, 3072). No batch padding —
    # the grid is ragged and Pallas masks the last partial output block.
    x2d = x_nchw.reshape(B, IN_FEATURES)

    TB = _choose_tb(B)
    grid = (pl.cdiv(B, TB),)

    # Advisory cost: useful flops/bytes (unpadded B, true OUT_FEATURES).
    cost = pl.CostEstimate(
        flops=2 * B * IN_FEATURES * OUT_FEATURES,
        transcendentals=0,
        bytes_accessed=(B * IN_FEATURES + IN_FEATURES * N_PAD + N_PAD
                        + B * OUT_FEATURES) * 4,
    )

    # Size the scoped VMEM limit to actual need (+ headroom), capped well below
    # v7x's 64 MiB physical VMEM and above v5e's 16 MiB scoped default.
    # (All operands counted double-buffered; weight/bias could be single-buffered
    # via pipeline_mode, but that saves only ~1.5 MiB here.)
    vmem_bytes = 2 * (TB * IN_FEATURES + TB * N_PAD
                      + IN_FEATURES * N_PAD + N_PAD) * 4
    vmem_limit = int(min(48 << 20, vmem_bytes + (16 << 20)))

    out_padded = pl.pallas_call(
        linear_kernel,
        out_shape=jax.ShapeDtypeStruct((B, N_PAD), dtype),
        grid_spec=pltpu.PrefetchScalarGridSpec(
            num_scalar_prefetch=0,
            grid=grid,
            in_specs=[
                # x tile marches over the batch; weight/bias stay VMEM-resident.
                pl.BlockSpec((TB, IN_FEATURES), lambda i: (i, 0)),
                pl.BlockSpec((IN_FEATURES, N_PAD), lambda i: (0, 0)),
                pl.BlockSpec((1, N_PAD), lambda i: (0, 0)),
            ],
            out_specs=pl.BlockSpec((TB, N_PAD), lambda i: (i, 0)),
        ),
        compiler_params=pltpu.CompilerParams(
            dimension_semantics=("parallel",),   # independent batch axis (2 TCs on v7x)
            vmem_limit_bytes=vmem_limit,
        ),
        cost_estimate=cost,
    )(x2d, w_pad_t, b_pad)

    # Slice away the 10 -> 128 lane padding.
    return out_padded[:, :OUT_FEATURES]


if __name__ == "__main__":
    key = jax.random.PRNGKey(0)
    k_x, k_w, k_b = jax.random.split(key, 3)

    # Deterministic parameter init mimicking nn.Linear default:
    # U(-1/sqrt(fan_in), 1/sqrt(fan_in)) with fan_in = 3072.
    bound = 1.0 / (IN_FEATURES ** 0.5)
    weight = jax.random.uniform(
        k_w, (OUT_FEATURES, IN_FEATURES), jnp.float32, minval=-bound, maxval=bound)
    bias = jax.random.uniform(
        k_b, (OUT_FEATURES,), jnp.float32, minval=-bound, maxval=bound)

    # One-time parameter prep (padding + pre-transpose), outside the hot path.
    w_pad_t, b_pad = prepare_linear_params(weight, bias)

    # Small CIFAR10-shaped batch (NCHW, as PyTorch would feed it).
    x = jax.random.normal(k_x, (2, 3, 32, 32), jnp.float32)

    y = linear_cifar10_forward(x, w_pad_t, b_pad)
    y = jax.block_until_ready(y)

    # Reference check in plain JAX (same math as torch.nn.Linear).
    y_ref = x.reshape(2, IN_FEATURES) @ weight.T + bias
    assert y.shape == (2, OUT_FEATURES)
    assert jnp.allclose(y, y_ref, atol=1e-4, rtol=1e-4)

    print("KERNEL_OK")
</pallas_src>

<mosaic_0001>
module attributes {stable_mosaic.version = 11 : i64} {
  func.func @linear_kernel(%arg0: i32, %arg1: memref<2x3072xf32, #tpu.memory_space<vmem>>, %arg2: memref<3072x128xf32, #tpu.memory_space<vmem>>, %arg3: memref<1x128xf32, #tpu.memory_space<vmem>>, %arg4: memref<2x128xf32, #tpu.memory_space<vmem>>) attributes {dimension_semantics = [#tpu.dimension_semantics<parallel>], iteration_bounds = array<i64: 1>, scalar_prefetch = 0 : i64, scratch_operands = 0 : i64, tpu.core_type = #tpu.core_type<tc>, window_params = [{transform_indices = @transform_0, window_bounds = array<i64: 2, 3072>}, {pipeline_mode = #tpu.pipeline_mode<synchronous>, transform_indices = @transform_1, window_bounds = array<i64: 3072, 128>}, {pipeline_mode = #tpu.pipeline_mode<synchronous>, transform_indices = @transform_2, window_bounds = array<i64: 1, 128>}, {transform_indices = @transform_3, window_bounds = array<i64: 2, 128>}]} {
    %c0 = arith.constant 0 : index
    %c0_0 = arith.constant 0 : index
    %0 = vector.load %arg1[%c0, %c0_0] : memref<2x3072xf32, #tpu.memory_space<vmem>>, vector<2x3072xf32>
    %c0_1 = arith.constant 0 : index
    %c0_2 = arith.constant 0 : index
    %1 = vector.load %arg2[%c0_1, %c0_2] : memref<3072x128xf32, #tpu.memory_space<vmem>>, vector<3072x128xf32>
    %cst = arith.constant dense<0.000000e+00> : vector<2x128xf32>
    %2 = tpu.matmul %0, %1, %cst {dimension_numbers = #tpu.dot_dimension_numbers<[1], [0], [0], [1], [0, 0, 1, 1], [], []>} : vector<2x3072xf32>, vector<3072x128xf32>, vector<2x128xf32> -> vector<2x128xf32>
    %c0_3 = arith.constant 0 : index
    %c0_4 = arith.constant 0 : index
    %3 = vector.load %arg3[%c0_3, %c0_4] : memref<1x128xf32, #tpu.memory_space<vmem>>, vector<1x128xf32>
    %4 = vector.broadcast %3 : vector<1x128xf32> to vector<2x128xf32>
    %5 = arith.addf %2, %4 : vector<2x128xf32>
    %c0_5 = arith.constant 0 : index
    %c0_6 = arith.constant 0 : index
    %6 = vector.load %arg4[%c0_5, %c0_6] : memref<2x128xf32, #tpu.memory_space<vmem>>, vector<2x128xf32>
    tpu.vector_store %arg4[%c0_5, %c0_6], %5 {strides = array<i32>} : memref<2x128xf32, #tpu.memory_space<vmem>>, vector<2x128xf32>,
    return
  }
  func.func @transform_0(%arg0: i32) -> (i32, i32) {
    %c0_i32 = arith.constant 0 : i32
    %c0_i32_0 = arith.constant 0 : i32
    return %arg0, %c0_i32 : i32, i32
  }
  func.func @transform_1(%arg0: i32) -> (i32, i32) {
    %c0_i32 = arith.constant 0 : i32
    %c0_i32_0 = arith.constant 0 : i32
    %c0_i32_1 = arith.constant 0 : i32
    return %c0_i32, %c0_i32_0 : i32, i32
  }
  func.func @transform_2(%arg0: i32) -> (i32, i32) {
    %c0_i32 = arith.constant 0 : i32
    %c0_i32_0 = arith.constant 0 : i32
    %c0_i32_1 = arith.constant 0 : i32
    return %c0_i32, %c0_i32_0 : i32, i32
  }
  func.func @transform_3(%arg0: i32) -> (i32, i32) {
    %c0_i32 = arith.constant 0 : i32
    %c0_i32_0 = arith.constant 0 : i32
    return %arg0, %c0_i32 : i32, i32
  }
}

</mosaic_0001>

<llo_original>
// kernel: tpu_custom_call.1
$region0: #{tpu_custom_call.1}
  #allocation0 [shape = 'u32[]', space=smem, size = 0x4, offset = 0x4, fixed_abs, tag = 'smem constant byte address 0x4 - core index']
  #allocation1 [shape = 'u32[144,128]{1,0:T(1,128)}', space=vmem, size = 0x12000, scoped, tag = 'internal scratch']
  %s0 = inlined_call_operand.hbm [shape: f32[2,3072], index: 0, kind: input, shape index: {}]
  %s1 = inlined_call_operand.hbm [shape: f32[3072,128], index: 1, kind: input, shape index: {}]
  %s2 = inlined_call_operand.hbm [shape: f32[1,128], index: 2, kind: input, shape index: {}]
  %s3 = inlined_call_operand.hbm [shape: f32[2,128], index: 3, kind: output, shape index: {}]
  %s4 = sld [smem:[#allocation0]]
  $region34: #{tpu_custom_call.1} parent=0
    _
  %s6 = ssub.s32 1, %s4
  %s7 = scalar_select 0, %s6, %s4
  $region1: #{tpu_custom_call.1} parent=0
    #allocation2 [shape = 'u8[24576]{0}', space=vmem, size = 0x6000, scoped, tag = 'input window, operand 0, single buffered']
    #allocation3 [shape = 's32[1]{0}', space=sflag, size = 0x4, scoped, tag = 'scoped memory for tpu_custom_call.1']
    #allocation4 [shape = 's32[1]{0}', space=sflag, size = 0x4, scoped, tag = 'scoped memory for tpu_custom_call.1']
    #allocation5 [shape = 'u8[1572864]{0}', space=vmem, size = 0x180000, scoped, tag = 'input window, operand 1, single buffered']
    #allocation6 [shape = 's32[1]{0}', space=sflag, size = 0x4, scoped, tag = 'scoped memory for tpu_custom_call.1']
    #allocation7 [shape = 'u8[512]{0}', space=vmem, size = 0x400, scoped, tag = 'input window, operand 2, single buffered']
    #allocation8 [shape = 'u8[1024]{0}', space=vmem, size = 0x400, scoped, tag = 'output window, operand 0, single buffered']
    %8 = vsyncpa [#allocation3], 0
    %9 = vsyncpa [#allocation6], 0
    %10 = vsyncpa [#allocation4], 0
    // Predicated region
    $region2: #{tpu_custom_call.1} parent=1 // pred_check
      _
    $region3: #{tpu_custom_call.1} parent=1 // pred_check_branch
      %12 = sbr.rel (0) target = $region5
    $region4: #{tpu_custom_call.1} parent=1 // pred_region
      %s14 = ssub.s32 768, 768
      %15 = vsyncadd [#allocation3], %s14
      %s17 = sshll.u32 [#allocation2], 4
      %s18 = int_to_ptr.vmem [resolvable:$true] %s17
      %20 = dma.hbm_to_vmem [thread:$0]  %s0, 768, %s18, [#allocation3]
    $region5: #{tpu_custom_call.1} parent=1 // pred_fallthru
      _
    // Predicated region
    $region6: #{tpu_custom_call.1} parent=1 // pred_check
      _
    $region7: #{tpu_custom_call.1} parent=1 // pred_check_branch
      %22 = sbr.rel (0) target = $region9
    $region8: #{tpu_custom_call.1} parent=1 // pred_region
      %s24 = ssub.s32 49152, 49152
      %25 = vsyncadd [#allocation6], %s24
      %s26 = sshll.u32 [#allocation5], 4
      %s27 = int_to_ptr.vmem [resolvable:$true] %s26
      %32 = dma.hbm_to_vmem [thread:$0]  %s1, 49152, %s27, [#allocation6], 128, 128, 8
    $region9: #{tpu_custom_call.1} parent=1 // pred_fallthru
      _
    // Predicated region
    $region10: #{tpu_custom_call.1} parent=1 // pred_check
      _
    $region11: #{tpu_custom_call.1} parent=1 // pred_check_branch
      %34 = sbr.rel (0) target = $region13
    $region12: #{tpu_custom_call.1} parent=1 // pred_region
      %s36 = ssub.s32 16, 16
      %37 = vsyncadd [#allocation6], %s36
      %s39 = sshll.u32 [#allocation7], 4
      %s40 = int_to_ptr.vmem [resolvable:$true] %s39
      %42 = dma.hbm_to_vmem [thread:$0]  %s2, 16, %s40, [#allocation6]
    $region13: #{tpu_custom_call.1} parent=1 // pred_fallthru
      _
    // Predicated region
    $region14: #{tpu_custom_call.1} parent=1 // pred_check
      _
    $region15: #{tpu_custom_call.1} parent=1 // pred_check_branch
      %44 = sbr.rel (0) target = $region17
    $region16: #{tpu_custom_call.1} parent=1 // pred_region
      %45 = dma.done [#allocation3], 768
    $region17: #{tpu_custom_call.1} parent=1 // pred_fallthru
      _
    // Predicated region
    $region18: #{tpu_custom_call.1} parent=1 // pred_check
      _
    $region19: #{tpu_custom_call.1} parent=1 // pred_check_branch
      %47 = sbr.rel (0) target = $region21
    $region20: #{tpu_custom_call.1} parent=1 // pred_region
      %48 = dma.done [#allocation6], 49152
    $region21: #{tpu_custom_call.1} parent=1 // pred_fallthru
      _
    // Predicated region
    $region22: #{tpu_custom_call.1} parent=1 // pred_check
      _
    $region23: #{tpu_custom_call.1} parent=1 // pred_check_branch
      %50 = sbr.rel (0) target = $region25
    $region24: #{tpu_custom_call.1} parent=1 // pred_region
      %51 = dma.done [#allocation6], 16
    $region25: #{tpu_custom_call.1} parent=1 // pred_fallthru
      _
    %v52 = vld [vmem:[#allocation2] sm:$0xff]
    %v53 = vld [vmem:[#allocation2 + $0x8] sm:$0xff]
    %v54 = vld [vmem:[#allocation2 + $0x10] sm:$0xff]
    %v55 = vld [vmem:[#allocation2 + $0x18] sm:$0xff]
    %v56 = vld [vmem:[#allocation2 + $0x20] sm:$0xff]
    %v57 = vld [vmem:[#allocation2 + $0x28] sm:$0xff]
    %v58 = vld [vmem:[#allocation5] sm:$0xff]
    %v59 = vld [vmem:[#allocation5 + $0x8] sm:$0xff]
    %v60 = vld [vmem:[#allocation5 + $0x10] sm:$0xff]
    %v61 = vld [vmem:[#allocation5 + $0x18] sm:$0xff]
    %v62 = vld [vmem:[#allocation5 + $0x20] sm:$0xff]
    %v63 = vld [vmem:[#allocation5 + $0x28] sm:$0xff]
    %v64 = vld [vmem:[#allocation5 + $0x30] sm:$0xff]
    %v65 = vld [vmem:[#allocation5 + $0x38] sm:$0xff]
    %v66 = vld [vmem:[#allocation5 + $0x40] sm:$0xff]
    %v67 = vld [vmem:[#allocation5 + $0x48] sm:$0xff]
    %v68 = vld [vmem:[#allocation5 + $0x50] sm:$0xff]
    %v69 = vld [vmem:[#allocation5 + $0x58] sm:$0xff]
    %v70 = vld [vmem:[#allocation5 + $0x60] sm:$0xff]
    %v71 = vld [vmem:[#allocation5 + $0x68] sm:$0xff]
    %v72 = vld [vmem:[#allocation5 + $0x70] sm:$0xff]
    %v73 = vld [vmem:[#allocation5 + $0x78] sm:$0xff]
    %v74 = vld [vmem:[#allocation5 + $0x80] sm:$0xff]
    %v75 = vld [vmem:[#allocation5 + $0x88] sm:$0xff]
    %v76 = vld [vmem:[#allocation5 + $0x90] sm:$0xff]
    %v77 = vld [vmem:[#allocation5 + $0x98] sm:$0xff]
    %v78 = vld [vmem:[#allocation5 + $0xa0] sm:$0xff]
    %v79 = vld [vmem:[#allocation5 + $0xa8] sm:$0xff]
    %v80 = vld [vmem:[#allocation5 + $0xb0] sm:$0xff]
    %v81 = vld [vmem:[#allocation5 + $0xb8] sm:$0xff]
    %v82 = vld [vmem:[#allocation5 + $0xc0] sm:$0xff]
    %v83 = vld [vmem:[#allocation5 + $0xc8] sm:$0xff]
    %v84 = vld [vmem:[#allocation5 + $0xd0] sm:$0xff]
    %v85 = vld [vmem:[#allocation5 + $0xd8] sm:$0xff]
    %v86 = vld [vmem:[#allocation5 + $0xe0] sm:$0xff]
    %v87 = vld [vmem:[#allocation5 + $0xe8] sm:$0xff]
    %v88 = vld [vmem:[#allocation5 + $0xf0] sm:$0xff]
    %v89 = vld [vmem:[#allocation5 + $0xf8] sm:$0xff]
    %v90 = vld [vmem:[#allocation5 + $0x100] sm:$0xff]
    %v91 = vld [vmem:[#allocation5 + $0x108] sm:$0xff]
    %v92 = vld [vmem:[#allocation5 + $0x110] sm:$0xff]
    %v93 = vld [vmem:[#allocation5 + $0x118] sm:$0xff]
    %v94 = vld [vmem:[#allocation5 + $0x120] sm:$0xff]
    %v95 = vld [vmem:[#allocation5 + $0x128] sm:$0xff]
    %v96 = vld [vmem:[#allocation5 + $0x130] sm:$0xff]
    %v97 = vld [vmem:[#allocation5 + $0x138] sm:$0xff]
    %v98 = vld [vmem:[#allocation5 + $0x140] sm:$0xff]
    %v99 = vld [vmem:[#allocation5 + $0x148] sm:$0xff]
    %v100 = vld [vmem:[#allocation5 + $0x150] sm:$0xff]
    %v101 = vld [vmem:[#allocation5 + $0x158] sm:$0xff]
    %v102 = vld [vmem:[#allocation5 + $0x160] sm:$0xff]
    %v103 = vld [vmem:[#allocation5 + $0x168] sm:$0xff]
    %v104 = vld [vmem:[#allocation5 + $0x170] sm:$0xff]
    %v105 = vld [vmem:[#allocation5 + $0x178] sm:$0xff]
    %v106 = vld [vmem:[#allocation5 + $0x180] sm:$0xff]
    %v107 = vld [vmem:[#allocation5 + $0x188] sm:$0xff]
    %v108 = vld [vmem:[#allocation5 + $0x190] sm:$0xff]
    %v109 = vld [vmem:[#allocation5 + $0x198] sm:$0xff]
    %v110 = vld [vmem:[#allocation5 + $0x1a0] sm:$0xff]
    %v111 = vld [vmem:[#allocation5 + $0x1a8] sm:$0xff]
    %v112 = vld [vmem:[#allocation5 + $0x1b0] sm:$0xff]
    %v113 = vld [vmem:[#allocation5 + $0x1b8] sm:$0xff]
    %v114 = vld [vmem:[#allocation5 + $0x1c0] sm:$0xff]
    %v115 = vld [vmem:[#allocation5 + $0x1c8] sm:$0xff]
    %v116 = vld [vmem:[#allocation5 + $0x1d0] sm:$0xff]
    %v117 = vld [vmem:[#allocation5 + $0x1d8] sm:$0xff]
    %v118 = vld [vmem:[#allocation5 + $0x1e0] sm:$0xff]
    %v119 = vld [vmem:[#allocation5 + $0x1e8] sm:$0xff]
    %v120 = vld [vmem:[#allocation5 + $0x1f0] sm:$0xff]
    %v121 = vld [vmem:[#allocation5 + $0x1f8] sm:$0xff]
    %v122 = vld [vmem:[#allocation5 + $0x200] sm:$0xff]
    %v123 = vld [vmem:[#allocation5 + $0x208] sm:$0xff]
    %v124 = vld [vmem:[#allocation5 + $0x210] sm:$0xff]
    %v125 = vld [vmem:[#allocation5 + $0x218] sm:$0xff]
    %v126 = vld [vmem:[#allocation5 + $0x220] sm:$0xff]
    %v127 = vld [vmem:[#allocation5 + $0x228] sm:$0xff]
    %v128 = vld [vmem:[#allocation5 + $0x230] sm:$0xff]
    %v129 = vld [vmem:[#allocation5 + $0x238] sm:$0xff]
    %v130 = vld [vmem:[#allocation5 + $0x240] sm:$0xff]
    %v131 = vld [vmem:[#allocation5 + $0x248] sm:$0xff]
    %v132 = vld [vmem:[#allocation5 + $0x250] sm:$0xff]
    %v133 = vld [vmem:[#allocation5 + $0x258] sm:$0xff]
    %v134 = vld [vmem:[#allocation5 + $0x260] sm:$0xff]
    %v135 = vld [vmem:[#allocation5 + $0x268] sm:$0xff]
    %v136 = vld [vmem:[#allocation5 + $0x270] sm:$0xff]
    %v137 = vld [vmem:[#allocation5 + $0x278] sm:$0xff]
    %v138 = vld [vmem:[#allocation5 + $0x280] sm:$0xff]
    %v139 = vld [vmem:[#allocation5 + $0x288] sm:$0xff]
    %v140 = vld [vmem:[#allocation5 + $0x290] sm:$0xff]
    %v141 = vld [vmem:[#allocation5 + $0x298] sm:$0xff]
    %v142 = vld [vmem:[#allocation5 + $0x2a0] sm:$0xff]
    %v143 = vld [vmem:[#allocation5 + $0x2a8] sm:$0xff]
    %v144 = vld [vmem:[#allocation5 + $0x2b0] sm:$0xff]
    %v145 = vld [vmem:[#allocation5 + $0x2b8] sm:$0xff]
    %v146 = vld [vmem:[#allocation5 + $0x2c0] sm:$0xff]
    %v147 = vld [vmem:[#allocation5 + $0x2c8] sm:$0xff]
    %v148 = vld [vmem:[#allocation5 + $0x2d0] sm:$0xff]
    %v149 = vld [vmem:[#allocation5 + $0x2d8] sm:$0xff]
    %v150 = vld [vmem:[#allocation5 + $0x2e0] sm:$0xff]
    %v151 = vld [vmem:[#allocation5 + $0x2e8] sm:$0xff]
    %v152 = vld [vmem:[#allocation5 + $0x2f0] sm:$0xff]
    %v153 = vld [vmem:[#allocation5 + $0x2f8] sm:$0xff]
    %v154 = vld [vmem:[#allocation5 + $0x300] sm:$0xff]
    %v155 = vld [vmem:[#allocation5 + $0x308] sm:$0xff]
    %v156 = vld [vmem:[#allocation5 + $0x310] sm:$0xff]
    %v157 = vld [vmem:[#allocation5 + $0x318] sm:$0xff]
    %v158 = vld [vmem:[#allocation5 + $0x320] sm:$0xff]
    %v159 = vld [vmem:[#allocation5 + $0x328] sm:$0xff]
    %v160 = vld [vmem:[#allocation5 + $0x330] sm:$0xff]
    %v161 = vld [vmem:[#allocation5 + $0x338] sm:$0xff]
    %v162 = vld [vmem:[#allocation5 + $0x340] sm:$0xff]
    %v163 = vld [vmem:[#allocation5 + $0x348] sm:$0xff]
    %v164 = vld [vmem:[#allocation5 + $0x350] sm:$0xff]
    %v165 = vld [vmem:[#allocation5 + $0x358] sm:$0xff]
    %v166 = vld [vmem:[#allocation5 + $0x360] sm:$0xff]
    %v167 = vld [vmem:[#allocation5 + $0x368] sm:$0xff]
    %v168 = vld [vmem:[#allocation5 + $0x370] sm:$0xff]
    %v169 = vld [vmem:[#allocation5 + $0x378] sm:$0xff]
    %v170 = vld [vmem:[#allocation5 + $0x380] sm:$0xff]
    %v171 = vld [vmem:[#allocation5 + $0x388] sm:$0xff]
    %v172 = vld [vmem:[#allocation5 + $0x390] sm:$0xff]
    %v173 = vld [vmem:[#allocation5 + $0x398] sm:$0xff]
    %v174 = vld [vmem:[#allocation5 + $0x3a0] sm:$0xff]
    %v175 = vld [vmem:[#allocation5 + $0x3a8] sm:$0xff]
    %v176 = vld [vmem:[#allocation5 + $0x3b0] sm:$0xff]
    %v177 = vld [vmem:[#allocation5 + $0x3b8] sm:$0xff]
    %v178 = vld [vmem:[#allocation5 + $0x3c0] sm:$0xff]
    %v179 = vld [vmem:[#allocation5 + $0x3c8] sm:$0xff]
    %v180 = vld [vmem:[#allocation5 + $0x3d0] sm:$0xff]
    %v181 = vld [vmem:[#allocation5 + $0x3d8] sm:$0xff]
    %v182 = vld [vmem:[#allocation5 + $0x3e0] sm:$0xff]
    %v183 = vld [vmem:[#allocation5 + $0x3e8] sm:$0xff]
    %v184 = vld [vmem:[#allocation5 + $0x3f0] sm:$0xff]
    %v185 = vld [vmem:[#allocation5 + $0x3f8] sm:$0xff]
    %v186 = vld [vmem:[#allocation5 + $0x400] sm:$0xff]
    %v187 = vld [vmem:[#allocation5 + $0x408] sm:$0xff]
    %v188 = vld [vmem:[#allocation5 + $0x410] sm:$0xff]
    %v189 = vld [vmem:[#allocation5 + $0x418] sm:$0xff]
    %v190 = vld [vmem:[#allocation5 + $0x420] sm:$0xff]
    %v191 = vld [vmem:[#allocation5 + $0x428] sm:$0xff]
    %v192 = vld [vmem:[#allocation5 + $0x430] sm:$0xff]
    %v193 = vld [vmem:[#allocation5 + $0x438] sm:$0xff]
    %v194 = vld [vmem:[#allocation5 + $0x440] sm:$0xff]
    %v195 = vld [vmem:[#allocation5 + $0x448] sm:$0xff]
    %v196 = vld [vmem:[#allocation5 + $0x450] sm:$0xff]
    %v197 = vld [vmem:[#allocation5 + $0x458] sm:$0xff]
    %v198 = vld [vmem:[#allocation5 + $0x460] sm:$0xff]
    %v199 = vld [vmem:[#allocation5 + $0x468] sm:$0xff]
    %v200 = vld [vmem:[#allocation5 + $0x470] sm:$0xff]
    %v201 = vld [vmem:[#allocation5 + $0x478] sm:$0xff]
    %v202 = vld [vmem:[#allocation5 + $0x480] sm:$0xff]
    %v203 = vld [vmem:[#allocation5 + $0x488] sm:$0xff]
    %v204 = vld [vmem:[#allocation5 + $0x490] sm:$0xff]
    %v205 = vld [vmem:[#allocation5 + $0x498] sm:$0xff]
    %v206 = vld [vmem:[#allocation5 + $0x4a0] sm:$0xff]
    %v207 = vld [vmem:[#allocation5 + $0x4a8] sm:$0xff]
    %v208 = vld [vmem:[#allocation5 + $0x4b0] sm:$0xff]
    %v209 = vld [vmem:[#allocation5 + $0x4b8] sm:$0xff]
    %v210 = vld [vmem:[#allocation5 + $0x4c0] sm:$0xff]
    %v211 = vld [vmem:[#allocation5 + $0x4c8] sm:$0xff]
    %v212 = vld [vmem:[#allocation5 + $0x4d0] sm:$0xff]
    %v213 = vld [vmem:[#allocation5 + $0x4d8] sm:$0xff]
    %v214 = vld [vmem:[#allocation5 + $0x4e0] sm:$0xff]
    %v215 = vld [vmem:[#allocation5 + $0x4e8] sm:$0xff]
    %v216 = vld [vmem:[#allocation5 + $0x4f0] sm:$0xff]
    %v217 = vld [vmem:[#allocation5 + $0x4f8] sm:$0xff]
    %v218 = vld [vmem:[#allocation5 + $0x500] sm:$0xff]
    %v219 = vld [vmem:[#allocation5 + $0x508] sm:$0xff]
    %v220 = vld [vmem:[#allocation5 + $0x510] sm:$0xff]
    %v221 = vld [vmem:[#allocation5 + $0x518] sm:$0xff]
    %v222 = vld [vmem:[#allocation5 + $0x520] sm:$0xff]
    %v223 = vld [vmem:[#allocation5 + $0x528] sm:$0xff]
    %v224 = vld [vmem:[#allocation5 + $0x530] sm:$0xff]
    %v225 = vld [vmem:[#allocation5 + $0x538] sm:$0xff]
    %v226 = vld [vmem:[#allocation5 + $0x540] sm:$0xff]
    %v227 = vld [vmem:[#allocation5 + $0x548] sm:$0xff]
    %v228 = vld [vmem:[#allocation5 + $0x550] sm:$0xff]
    %v229 = vld [vmem:[#allocation5 + $0x558] sm:$0xff]
    %v230 = vld [vmem:[#allocation5 + $0x560] sm:$0xff]
    %v231 = vld [vmem:[#allocation5 + $0x568] sm:$0xff]
    %v232 = vld [vmem:[#allocation5 + $0x570] sm:$0xff]
    %v233 = vld [vmem:[#allocation5 + $0x578] sm:$0xff]
    %v234 = vld [vmem:[#allocation5 + $0x580] sm:$0xff]
    %v235 = vld [vmem:[#allocation5 + $0x588] sm:$0xff]
    %v236 = vld [vmem:[#allocation5 + $0x590] sm:$0xff]
    %v237 = vld [vmem:[#allocation5 + $0x598] sm:$0xff]
    %v238 = vld [vmem:[#allocation5 + $0x5a0] sm:$0xff]
    %v239 = vld [vmem:[#allocation5 + $0x5a8] sm:$0xff]
    %v240 = vld [vmem:[#allocation5 + $0x5b0] sm:$0xff]
    %v241 = vld [vmem:[#allocation5 + $0x5b8] sm:$0xff]
    %v242 = vld [vmem:[#allocation5 + $0x5c0] sm:$0xff]
    %v243 = vld [vmem:[#allocation5 + $0x5c8] sm:$0xff]
    %v244 = vld [vmem:[#allocation5 + $0x5d0] sm:$0xff]
    %v245 = vld [vmem:[#allocation5 + $0x5d8] sm:$0xff]
    %v246 = vld [vmem:[#allocation5 + $0x5e0] sm:$0xff]
    %v247 = vld [vmem:[#allocation5 + $0x5e8] sm:$0xff]
    %v248 = vld [vmem:[#allocation5 + $0x5f0] sm:$0xff]
    %v249 = vld [vmem:[#allocation5 + $0x5f8] sm:$0xff]
    %v250 = vld [vmem:[#allocation5 + $0x600] sm:$0xff]
    %v251 = vld [vmem:[#allocation5 + $0x608] sm:$0xff]
    %v252 = vld [vmem:[#allocation5 + $0x610] sm:$0xff]
    %v253 = vld [vmem:[#allocation5 + $0x618] sm:$0xff]
    %v254 = vld [vmem:[#allocation5 + $0x620] sm:$0xff]
    %v255 = vld [vmem:[#allocation5 + $0x628] sm:$0xff]
    %v256 = vld [vmem:[#allocation5 + $0x630] sm:$0xff]
    %v257 = vld [vmem:[#allocation5 + $0x638] sm:$0xff]
    %v258 = vld [vmem:[#allocation5 + $0x640] sm:$0xff]
    %v259 = vld [vmem:[#allocation5 + $0x648] sm:$0xff]
    %v260 = vld [vmem:[#allocation5 + $0x650] sm:$0xff]
    %v261 = vld [vmem:[#allocation5 + $0x658] sm:$0xff]
    %v262 = vld [vmem:[#allocation5 + $0x660] sm:$0xff]
    %v263 = vld [vmem:[#allocation5 + $0x668] sm:$0xff]
    %v264 = vld [vmem:[#allocation5 + $0x670] sm:$0xff]
    %v265 = vld [vmem:[#allocation5 + $0x678] sm:$0xff]
    %v266 = vld [vmem:[#allocation5 + $0x680] sm:$0xff]
    %v267 = vld [vmem:[#allocation5 + $0x688] sm:$0xff]
    %v268 = vld [vmem:[#allocation5 + $0x690] sm:$0xff]
    %v269 = vld [vmem:[#allocation5 + $0x698] sm:$0xff]
    %v270 = vld [vmem:[#allocation5 + $0x6a0] sm:$0xff]
    %v271 = vld [vmem:[#allocation5 + $0x6a8] sm:$0xff]
    %v272 = vld [vmem:[#allocation5 + $0x6b0] sm:$0xff]
    %v273 = vld [vmem:[#allocation5 + $0x6b8] sm:$0xff]
    %v274 = vld [vmem:[#allocation5 + $0x6c0] sm:$0xff]
    %v275 = vld [vmem:[#allocation5 + $0x6c8] sm:$0xff]
    %v276 = vld [vmem:[#allocation5 + $0x6d0] sm:$0xff]
    %v277 = vld [vmem:[#allocation5 + $0x6d8] sm:$0xff]
    %v278 = vld [vmem:[#allocation5 + $0x6e0] sm:$0xff]
    %v279 = vld [vmem:[#allocation5 + $0x6e8] sm:$0xff]
    %v280 = vld [vmem:[#allocation5 + $0x6f0] sm:$0xff]
    %v281 = vld [vmem:[#allocation5 + $0x6f8] sm:$0xff]
    %v282 = vld [vmem:[#allocation5 + $0x700] sm:$0xff]
    %v283 = vld [vmem:[#allocation5 + $0x708] sm:$0xff]
    %v284 = vld [vmem:[#allocation5 + $0x710] sm:$0xff]
    %v285 = vld [vmem:[#allocation5 + $0x718] sm:$0xff]
    %v286 = vld [vmem:[#allocation5 + $0x720] sm:$0xff]
    %v287 = vld [vmem:[#allocation5 + $0x728] sm:$0xff]
    %v288 = vld [vmem:[#allocation5 + $0x730] sm:$0xff]
    %v289 = vld [vmem:[#allocation5 + $0x738] sm:$0xff]
    %v290 = vld [vmem:[#allocation5 + $0x740] sm:$0xff]
    %v291 = vld [vmem:[#allocation5 + $0x748] sm:$0xff]
    %v292 = vld [vmem:[#allocation5 + $0x750] sm:$0xff]
    %v293 = vld [vmem:[#allocation5 + $0x758] sm:$0xff]
    %v294 = vld [vmem:[#allocation5 + $0x760] sm:$0xff]
    %v295 = vld [vmem:[#allocation5 + $0x768] sm:$0xff]
    %v296 = vld [vmem:[#allocation5 + $0x770] sm:$0xff]
    %v297 = vld [vmem:[#allocation5 + $0x778] sm:$0xff]
    %v298 = vld [vmem:[#allocation5 + $0x780] sm:$0xff]
    %v299 = vld [vmem:[#allocation5 + $0x788] sm:$0xff]
    %v300 = vld [vmem:[#allocation5 + $0x790] sm:$0xff]
    %v301 = vld [vmem:[#allocation5 + $0x798] sm:$0xff]
    %v302 = vld [vmem:[#allocation5 + $0x7a0] sm:$0xff]
    %v303 = vld [vmem:[#allocation5 + $0x7a8] sm:$0xff]
    %v304 = vld [vmem:[#allocation5 + $0x7b0] sm:$0xff]
    %v305 = vld [vmem:[#allocation5 + $0x7b8] sm:$0xff]
    %v306 = vld [vmem:[#allocation5 + $0x7c0] sm:$0xff]
    %v307 = vld [vmem:[#allocation5 + $0x7c8] sm:$0xff]
    %v308 = vld [vmem:[#allocation5 + $0x7d0] sm:$0xff]
    %v309 = vld [vmem:[#allocation5 + $0x7d8] sm:$0xff]
    %v310 = vld [vmem:[#allocation5 + $0x7e0] sm:$0xff]
    %v311 = vld [vmem:[#allocation5 + $0x7e8] sm:$0xff]
    %v312 = vld [vmem:[#allocation5 + $0x7f0] sm:$0xff]
    %v313 = vld [vmem:[#allocation5 + $0x7f8] sm:$0xff]
    %v314 = vld [vmem:[#allocation5 + $0x800] sm:$0xff]
    %v315 = vld [vmem:[#allocation5 + $0x808] sm:$0xff]
    %v316 = vld [vmem:[#allocation5 + $0x810] sm:$0xff]
    %v317 = vld [vmem:[#allocation5 + $0x818] sm:$0xff]
    %v318 = vld [vmem:[#allocation5 + $0x820] sm:$0xff]
    %v319 = vld [vmem:[#allocation5 + $0x828] sm:$0xff]
    %v320 = vld [vmem:[#allocation5 + $0x830] sm:$0xff]
    %v321 = vld [vmem:[#allocation5 + $0x838] sm:$0xff]
    %v322 = vld [vmem:[#allocation5 + $0x840] sm:$0xff]
    %v323 = vld [vmem:[#allocation5 + $0x848] sm:$0xff]
    %v324 = vld [vmem:[#allocation5 + $0x850] sm:$0xff]
    %v325 = vld [vmem:[#allocation5 + $0x858] sm:$0xff]
    %v326 = vld [vmem:[#allocation5 + $0x860] sm:$0xff]
    %v327 = vld [vmem:[#allocation5 + $0x868] sm:$0xff]
    %v328 = vld [vmem:[#allocation5 + $0x870] sm:$0xff]
    %v329 = vld [vmem:[#allocation5 + $0x878] sm:$0xff]
    %v330 = vld [vmem:[#allocation5 + $0x880] sm:$0xff]
    %v331 = vld [vmem:[#allocation5 + $0x888] sm:$0xff]
    %v332 = vld [vmem:[#allocation5 + $0x890] sm:$0xff]
    %v333 = vld [vmem:[#allocation5 + $0x898] sm:$0xff]
    %v334 = vld [vmem:[#allocation5 + $0x8a0] sm:$0xff]
    %v335 = vld [vmem:[#allocation5 + $0x8a8] sm:$0xff]
    %v336 = vld [vmem:[#allocation5 + $0x8b0] sm:$0xff]
    %v337 = vld [vmem:[#allocation5 + $0x8b8] sm:$0xff]
    %v338 = vld [vmem:[#allocation5 + $0x8c0] sm:$0xff]
    %v339 = vld [vmem:[#allocation5 + $0x8c8] sm:$0xff]
    %v340 = vld [vmem:[#allocation5 + $0x8d0] sm:$0xff]
    %v341 = vld [vmem:[#allocation5 + $0x8d8] sm:$0xff]
    %v342 = vld [vmem:[#allocation5 + $0x8e0] sm:$0xff]
    %v343 = vld [vmem:[#allocation5 + $0x8e8] sm:$0xff]
    %v344 = vld [vmem:[#allocation5 + $0x8f0] sm:$0xff]
    %v345 = vld [vmem:[#allocation5 + $0x8f8] sm:$0xff]
    %v346 = vld [vmem:[#allocation5 + $0x900] sm:$0xff]
    %v347 = vld [vmem:[#allocation5 + $0x908] sm:$0xff]
    %v348 = vld [vmem:[#allocation5 + $0x910] sm:$0xff]
    %v349 = vld [vmem:[#allocation5 + $0x918] sm:$0xff]
    %v350 = vld [vmem:[#allocation5 + $0x920] sm:$0xff]
    %v351 = vld [vmem:[#allocation5 + $0x928] sm:$0xff]
    %v352 = vld [vmem:[#allocation5 + $0x930] sm:$0xff]
    %v353 = vld [vmem:[#allocation5 + $0x938] sm:$0xff]
    %v354 = vld [vmem:[#allocation5 + $0x940] sm:$0xff]
    %v355 = vld [vmem:[#allocation5 + $0x948] sm:$0xff]
    %v356 = vld [vmem:[#allocation5 + $0x950] sm:$0xff]
    %v357 = vld [vmem:[#allocation5 + $0x958] sm:$0xff]
    %v358 = vld [vmem:[#allocation5 + $0x960] sm:$0xff]
    %v359 = vld [vmem:[#allocation5 + $0x968] sm:$0xff]
    %v360 = vld [vmem:[#allocation5 + $0x970] sm:$0xff]
    %v361 = vld [vmem:[#allocation5 + $0x978] sm:$0xff]
    %v362 = vld [vmem:[#allocation5 + $0x980] sm:$0xff]
    %v363 = vld [vmem:[#allocation5 + $0x988] sm:$0xff]
    %v364 = vld [vmem:[#allocation5 + $0x990] sm:$0xff]
    %v365 = vld [vmem:[#allocation5 + $0x998] sm:$0xff]
    %v366 = vld [vmem:[#allocation5 + $0x9a0] sm:$0xff]
    %v367 = vld [vmem:[#allocation5 + $0x9a8] sm:$0xff]
    %v368 = vld [vmem:[#allocation5 + $0x9b0] sm:$0xff]
    %v369 = vld [vmem:[#allocation5 + $0x9b8] sm:$0xff]
    %v370 = vld [vmem:[#allocation5 + $0x9c0] sm:$0xff]
    %v371 = vld [vmem:[#allocation5 + $0x9c8] sm:$0xff]
    %v372 = vld [vmem:[#allocation5 + $0x9d0] sm:$0xff]
    %v373 = vld [vmem:[#allocation5 + $0x9d8] sm:$0xff]
    %v374 = vld [vmem:[#allocation5 + $0x9e0] sm:$0xff]
    %v375 = vld [vmem:[#allocation5 + $0x9e8] sm:$0xff]
    %v376 = vld [vmem:[#allocation5 + $0x9f0] sm:$0xff]
    %v377 = vld [vmem:[#allocation5 + $0x9f8] sm:$0xff]
    %v378 = vld [vmem:[#allocation5 + $0xa00] sm:$0xff]
    %v379 = vld [vmem:[#allocation5 + $0xa08] sm:$0xff]
    %v380 = vld [vmem:[#allocation5 + $0xa10] sm:$0xff]
    %v381 = vld [vmem:[#allocation5 + $0xa18] sm:$0xff]
    %v382 = vld [vmem:[#allocation5 + $0xa20] sm:$0xff]
    %v383 = vld [vmem:[#allocation5 + $0xa28] sm:$0xff]
    %v384 = vld [vmem:[#allocation5 + $0xa30] sm:$0xff]
    %v385 = vld [vmem:[#allocation5 + $0xa38] sm:$0xff]
    %v386 = vld [vmem:[#allocation5 + $0xa40] sm:$0xff]
    %v387 = vld [vmem:[#allocation5 + $0xa48] sm:$0xff]
    %v388 = vld [vmem:[#allocation5 + $0xa50] sm:$0xff]
    %v389 = vld [vmem:[#allocation5 + $0xa58] sm:$0xff]
    %v390 = vld [vmem:[#allocation5 + $0xa60] sm:$0xff]
    %v391 = vld [vmem:[#allocation5 + $0xa68] sm:$0xff]
    %v392 = vld [vmem:[#allocation5 + $0xa70] sm:$0xff]
    %v393 = vld [vmem:[#allocation5 + $0xa78] sm:$0xff]
    %v394 = vld [vmem:[#allocation5 + $0xa80] sm:$0xff]
    %v395 = vld [vmem:[#allocation5 + $0xa88] sm:$0xff]
    %v396 = vld [vmem:[#allocation5 + $0xa90] sm:$0xff]
    %v397 = vld [vmem:[#allocation5 + $0xa98] sm:$0xff]
    %v398 = vld [vmem:[#allocation5 + $0xaa0] sm:$0xff]
    %v399 = vld [vmem:[#allocation5 + $0xaa8] sm:$0xff]
    %v400 = vld [vmem:[#allocation5 + $0xab0] sm:$0xff]
    %v401 = vld [vmem:[#allocation5 + $0xab8] sm:$0xff]
    %v402 = vld [vmem:[#allocation5 + $0xac0] sm:$0xff]
    %v403 = vld [vmem:[#allocation5 + $0xac8] sm:$0xff]
    %v404 = vld [vmem:[#allocation5 + $0xad0] sm:$0xff]
    %v405 = vld [vmem:[#allocation5 + $0xad8] sm:$0xff]
    %v406 = vld [vmem:[#allocation5 + $0xae0] sm:$0xff]
    %v407 = vld [vmem:[#allocation5 + $0xae8] sm:$0xff]
    %v408 = vld [vmem:[#allocation5 + $0xaf0] sm:$0xff]
    %v409 = vld [vmem:[#allocation5 + $0xaf8] sm:$0xff]
    %v410 = vld [vmem:[#allocation5 + $0xb00] sm:$0xff]
    %v411 = vld [vmem:[#allocation5 + $0xb08] sm:$0xff]
    %v412 = vld [vmem:[#allocation5 + $0xb10] sm:$0xff]
    %v413 = vld [vmem:[#allocation5 + $0xb18] sm:$0xff]
    %v414 = vld [vmem:[#allocation5 + $0xb20] sm:$0xff]
    %v415 = vld [vmem:[#allocation5 + $0xb28] sm:$0xff]
    %v416 = vld [vmem:[#allocation5 + $0xb30] sm:$0xff]
    %v417 = vld [vmem:[#allocation5 + $0xb38] sm:$0xff]
    %v418 = vld [vmem:[#allocation5 + $0xb40] sm:$0xff]
    %v419 = vld [vmem:[#allocation5 + $0xb48] sm:$0xff]
    %v420 = vld [vmem:[#allocation5 + $0xb50] sm:$0xff]
    %v421 = vld [vmem:[#allocation5 + $0xb58] sm:$0xff]
    %v422 = vld [vmem:[#allocation5 + $0xb60] sm:$0xff]
    %v423 = vld [vmem:[#allocation5 + $0xb68] sm:$0xff]
    %v424 = vld [vmem:[#allocation5 + $0xb70] sm:$0xff]
    %v425 = vld [vmem:[#allocation5 + $0xb78] sm:$0xff]
    %v426 = vld [vmem:[#allocation5 + $0xb80] sm:$0xff]
    %v427 = vld [vmem:[#allocation5 + $0xb88] sm:$0xff]
    %v428 = vld [vmem:[#allocation5 + $0xb90] sm:$0xff]
    %v429 = vld [vmem:[#allocation5 + $0xb98] sm:$0xff]
    %v430 = vld [vmem:[#allocation5 + $0xba0] sm:$0xff]
    %v431 = vld [vmem:[#allocation5 + $0xba8] sm:$0xff]
    %v432 = vld [vmem:[#allocation5 + $0xbb0] sm:$0xff]
    %v433 = vld [vmem:[#allocation5 + $0xbb8] sm:$0xff]
    %v434 = vld [vmem:[#allocation5 + $0xbc0] sm:$0xff]
    %v435 = vld [vmem:[#allocation5 + $0xbc8] sm:$0xff]
    %v436 = vld [vmem:[#allocation5 + $0xbd0] sm:$0xff]
    %v437 = vld [vmem:[#allocation5 + $0xbd8] sm:$0xff]
    %v438 = vld [vmem:[#allocation5 + $0xbe0] sm:$0xff]
    %v439 = vld [vmem:[#allocation5 + $0xbe8] sm:$0xff]
    %v440 = vld [vmem:[#allocation5 + $0xbf0] sm:$0xff]
    %v441 = vld [vmem:[#allocation5 + $0xbf8] sm:$0xff]
    %v442 = vld [vmem:[#allocation7] sm:$0x1]
    %v444 = vlaneseq
    %v445 = vshrl.u32 %v444, 7
    %v446 = vsub.s32 0, %v445
    %v447 = vrot.slane %v442, %v446
    %v455 = vcombine.high %v52, %v52
    %v457 = vunpack.c.l.s4 1983009808
    %v458 = vunpack.c.0.s8 %v457
    %v459 = vlaneseq
    %v460 = vshrl.u32 %v459, 7
    %v461 = vsub.s32 %v458, %v460
    %v462 = vrot.slane %v52, %v461
    %v464 = vunpack.c.l.s4 1983009808
    %v465 = vunpack.c.0.s8 %v464
    %v466 = vlaneseq
    %v467 = vshrl.u32 %v466, 7
    %v468 = vsub.s32 %v465, %v467
    %v469 = vrot.slane %v455, %v468
    %v470 = vcombine.high %v462, %v462
    %v471 = vcombine.high %v469, %v469
    %v472 = vcombine.high %v53, %v53
    %v474 = vunpack.c.l.s4 1983009808
    %v475 = vunpack.c.0.s8 %v474
    %v476 = vlaneseq
    %v477 = vshrl.u32 %v476, 7
    %v478 = vsub.s32 %v475, %v477
    %v479 = vrot.slane %v53, %v478
    %v481 = vunpack.c.l.s4 1983009808
    %v482 = vunpack.c.0.s8 %v481
    %v483 = vlaneseq
    %v484 = vshrl.u32 %v483, 7
    %v485 = vsub.s32 %v482, %v484
    %v486 = vrot.slane %v472, %v485
    %v487 = vcombine.high %v479, %v479
    %v488 = vcombine.high %v486, %v486
    %v489 = vcombine.high %v54, %v54
    %v491 = vunpack.c.l.s4 1983009808
    %v492 = vunpack.c.0.s8 %v491
    %v493 = vlaneseq
    %v494 = vshrl.u32 %v493, 7
    %v495 = vsub.s32 %v492, %v494
    %v496 = vrot.slane %v54, %v495
    %v498 = vunpack.c.l.s4 1983009808
    %v499 = vunpack.c.0.s8 %v498
    %v500 = vlaneseq
    %v501 = vshrl.u32 %v500, 7
    %v502 = vsub.s32 %v499, %v501
    %v503 = vrot.slane %v489, %v502
    %v504 = vcombine.high %v496, %v496
    %v505 = vcombine.high %v503, %v503
    %v506 = vcombine.high %v55, %v55
    %v508 = vunpack.c.l.s4 1983009808
    %v509 = vunpack.c.0.s8 %v508
    %v510 = vlaneseq
    %v511 = vshrl.u32 %v510, 7
    %v512 = vsub.s32 %v509, %v511
    %v513 = vrot.slane %v55, %v512
    %v515 = vunpack.c.l.s4 1983009808
    %v516 = vunpack.c.0.s8 %v515
    %v517 = vlaneseq
    %v518 = vshrl.u32 %v517, 7
    %v519 = vsub.s32 %v516, %v518
    %v520 = vrot.slane %v506, %v519
    %v521 = vcombine.high %v513, %v513
    %v522 = vcombine.high %v520, %v520
    %v523 = vcombine.high %v56, %v56
    %v525 = vunpack.c.l.s4 1983009808
    %v526 = vunpack.c.0.s8 %v525
    %v527 = vlaneseq
    %v528 = vshrl.u32 %v527, 7
    %v529 = vsub.s32 %v526, %v528
    %v530 = vrot.slane %v56, %v529
    %v532 = vunpack.c.l.s4 1983009808
    %v533 = vunpack.c.0.s8 %v532
    %v534 = vlaneseq
    %v535 = vshrl.u32 %v534, 7
    %v536 = vsub.s32 %v533, %v535
    %v537 = vrot.slane %v523, %v536
    %v538 = vcombine.high %v530, %v530
    %v539 = vcombine.high %v537, %v537
    %v540 = vcombine.high %v57, %v57
    %v542 = vunpack.c.l.s4 1983009808
    %v543 = vunpack.c.0.s8 %v542
    %v544 = vlaneseq
    %v545 = vshrl.u32 %v544, 7
    %v546 = vsub.s32 %v543, %v545
    %v547 = vrot.slane %v57, %v546
    %v549 = vunpack.c.l.s4 1983009808
    %v550 = vunpack.c.0.s8 %v549
    %v551 = vlaneseq
    %v552 = vshrl.u32 %v551, 7
    %v553 = vsub.s32 %v550, %v552
    %v554 = vrot.slane %v540, %v553
    %v555 = vcombine.high %v547, %v547
    %v556 = vcombine.high %v554, %v554
    %581 = vmatprep.subr.mxu0 0.0
    %582 = vmatpush1.msra.mxu0 %v58
    %583 = vmatprep.subr.mxu0 0.0
    %584 = vmatpush1.msra.mxu0 %v59
    %585 = vmatprep.subr.mxu0 0.0
    %586 = vmatpush1.msra.mxu0 %v60
    %587 = vmatprep.subr.mxu0 0.0
    %588 = vmatpush1.msra.mxu0 %v61
    %589 = vmatprep.subr.mxu0 0.0
    %590 = vmatpush1.msra.mxu0 %v62
    %591 = vmatprep.subr.mxu0 0.0
    %592 = vmatpush1.msra.mxu0 %v63
    %593 = vmatprep.subr.mxu0 0.0
    %594 = vmatpush1.msra.mxu0 %v64
    %595 = vmatprep.subr.mxu0 0.0
    %596 = vmatpush1.msra.mxu0 %v65
    %597 = vmatprep.subr.mxu0 0.0
    %598 = vmatpush1.msra.mxu0 %v66
    %599 = vmatprep.subr.mxu0 0.0
    %600 = vmatpush1.msra.mxu0 %v67
    %601 = vmatprep.subr.mxu0 0.0
    %602 = vmatpush1.msra.mxu0 %v68
    %603 = vmatprep.subr.mxu0 0.0
    %604 = vmatpush1.msra.mxu0 %v69
    %605 = vmatprep.subr.mxu0 0.0
    %606 = vmatpush1.msra.mxu0 %v70
    %607 = vmatprep.subr.mxu0 0.0
    %608 = vmatpush1.msra.mxu0 %v71
    %609 = vmatprep.subr.mxu0 0.0
    %610 = vmatpush1.msra.mxu0 %v72
    %611 = vmatprep.subr.mxu0 0.0
    %612 = vmatpush1.msra.mxu0 %v73
    %613 = vmatprep.subr.mxu0 0.0
    %614 = vmatpush1.msra.mxu0 %v74
    %615 = vmatprep.subr.mxu0 0.0
    %616 = vmatpush1.msra.mxu0 %v75
    %617 = vmatprep.subr.mxu0 0.0
    %618 = vmatpush1.msra.mxu0 %v76
    %619 = vmatprep.subr.mxu0 0.0
    %620 = vmatpush1.msra.mxu0 %v77
    %621 = vmatprep.subr.mxu0 0.0
    %622 = vmatpush1.msra.mxu0 %v78
    %623 = vmatprep.subr.mxu0 0.0
    %624 = vmatpush1.msra.mxu0 %v79
    %625 = vmatprep.subr.mxu0 0.0
    %626 = vmatpush1.msra.mxu0 %v80
    %627 = vmatprep.subr.mxu0 0.0
    %628 = vmatpush1.msra.mxu0 %v81
    %629 = vmatprep.subr.mxu0 0.0
    %630 = vmatpush1.msra.mxu0 %v82
    %631 = vmatprep.subr.mxu0 0.0
    %632 = vmatpush1.msra.mxu0 %v83
    %633 = vmatprep.subr.mxu0 0.0
    %634 = vmatpush1.msra.mxu0 %v84
    %635 = vmatprep.subr.mxu0 0.0
    %636 = vmatpush1.msra.mxu0 %v85
    %637 = vmatprep.subr.mxu0 0.0
    %638 = vmatpush1.msra.mxu0 %v86
    %639 = vmatprep.subr.mxu0 0.0
    %640 = vmatpush1.msra.mxu0 %v87
    %641 = vmatprep.subr.mxu0 0.0
    %642 = vmatpush1.msra.mxu0 %v88
    %643 = vmatprep.subr.mxu0 0.0
    %644 = vmatpush1.msra.mxu0 %v89
    %645 = vmatprep.mubr.f32.mxu0 %v470
    %646 = vmatmul.mubr.f32.gmra.mrb[0].mxu0 %v462
    %v647 = vpop.f32.mrb[0].mxu0
    %v648 = vadd.f32 %v447, %v647
    %v649 = vpop.f32.mrb[0].mxu0
    %650 = vdwg.mxu0
    %651 = vmatprep.subr.mxu0 0.0
    %652 = vmatpush1.msra.mxu0 %v90
    %653 = vmatprep.subr.mxu0 0.0
    %654 = vmatpush1.msra.mxu0 %v91
    %655 = vmatprep.subr.mxu0 0.0
    %656 = vmatpush1.msra.mxu0 %v92
    %657 = vmatprep.subr.mxu0 0.0
    %658 = vmatpush1.msra.mxu0 %v93
    %659 = vmatprep.subr.mxu0 0.0
    %660 = vmatpush1.msra.mxu0 %v94
    %661 = vmatprep.subr.mxu0 0.0
    %662 = vmatpush1.msra.mxu0 %v95
    %663 = vmatprep.subr.mxu0 0.0
    %664 = vmatpush1.msra.mxu0 %v96
    %665 = vmatprep.subr.mxu0 0.0
    %666 = vmatpush1.msra.mxu0 %v97
    %667 = vmatprep.subr.mxu0 0.0
    %668 = vmatpush1.msra.mxu0 %v98
    %669 = vmatprep.subr.mxu0 0.0
    %670 = vmatpush1.msra.mxu0 %v99
    %671 = vmatprep.subr.mxu0 0.0
    %672 = vmatpush1.msra.mxu0 %v100
    %673 = vmatprep.subr.mxu0 0.0
    %674 = vmatpush1.msra.mxu0 %v101
    %675 = vmatprep.subr.mxu0 0.0
    %676 = vmatpush1.msra.mxu0 %v102
    %677 = vmatprep.subr.mxu0 0.0
    %678 = vmatpush1.msra.mxu0 %v103
    %679 = vmatprep.subr.mxu0 0.0
    %680 = vmatpush1.msra.mxu0 %v104
    %681 = vmatprep.subr.mxu0 0.0
    %682 = vmatpush1.msra.mxu0 %v105
    %683 = vmatprep.subr.mxu0 0.0
    %684 = vmatpush1.msra.mxu0 %v106
    %685 = vmatprep.subr.mxu0 0.0
    %686 = vmatpush1.msra.mxu0 %v107
    %687 = vmatprep.subr.mxu0 0.0
    %688 = vmatpush1.msra.mxu0 %v108
    %689 = vmatprep.subr.mxu0 0.0
    %690 = vmatpush1.msra.mxu0 %v109
    %691 = vmatprep.subr.mxu0 0.0
    %692 = vmatpush1.msra.mxu0 %v110
    %693 = vmatprep.subr.mxu0 0.0
    %694 = vmatpush1.msra.mxu0 %v111
    %695 = vmatprep.subr.mxu0 0.0
    %696 = vmatpush1.msra.mxu0 %v112
    %697 = vmatprep.subr.mxu0 0.0
    %698 = vmatpush1.msra.mxu0 %v113
    %699 = vmatprep.subr.mxu0 0.0
    %700 = vmatpush1.msra.mxu0 %v114
    %701 = vmatprep.subr.mxu0 0.0
    %702 = vmatpush1.msra.mxu0 %v115
    %703 = vmatprep.subr.mxu0 0.0
    %704 = vmatpush1.msra.mxu0 %v116
    %705 = vmatprep.subr.mxu0 0.0
    %706 = vmatpush1.msra.mxu0 %v117
    %707 = vmatprep.subr.mxu0 0.0
    %708 = vmatpush1.msra.mxu0 %v118
    %709 = vmatprep.subr.mxu0 0.0
    %710 = vmatpush1.msra.mxu0 %v119
    %711 = vmatprep.subr.mxu0 0.0
    %712 = vmatpush1.msra.mxu0 %v120
    %713 = vmatprep.subr.mxu0 0.0
    %714 = vmatpush1.msra.mxu0 %v121
    %715 = vmatprep.mubr.f32.mxu0 %v471
    %716 = vmatmul.mubr.f32.gmra.mrb[0].mxu0 %v469
    %v717 = vpop.f32.mrb[0].mxu0
    %v718 = vadd.f32 %v648, %v717
    %v719 = vpop.f32.mrb[0].mxu0
    %720 = vdwg.mxu0
    %721 = vmatprep.subr.mxu0 0.0
    %722 = vmatpush1.msra.mxu0 %v122
    %723 = vmatprep.subr.mxu0 0.0
    %724 = vmatpush1.msra.mxu0 %v123
    %725 = vmatprep.subr.mxu0 0.0
    %726 = vmatpush1.msra.mxu0 %v124
    %727 = vmatprep.subr.mxu0 0.0
    %728 = vmatpush1.msra.mxu0 %v125
    %729 = vmatprep.subr.mxu0 0.0
    %730 = vmatpush1.msra.mxu0 %v126
    %731 = vmatprep.subr.mxu0 0.0
    %732 = vmatpush1.msra.mxu0 %v127
    %733 = vmatprep.subr.mxu0 0.0
    %734 = vmatpush1.msra.mxu0 %v128
    %735 = vmatprep.subr.mxu0 0.0
    %736 = vmatpush1.msra.mxu0 %v129
    %737 = vmatprep.subr.mxu0 0.0
    %738 = vmatpush1.msra.mxu0 %v130
    %739 = vmatprep.subr.mxu0 0.0
    %740 = vmatpush1.msra.mxu0 %v131
    %741 = vmatprep.subr.mxu0 0.0
    %742 = vmatpush1.msra.mxu0 %v132
    %743 = vmatprep.subr.mxu0 0.0
    %744 = vmatpush1.msra.mxu0 %v133
    %745 = vmatprep.subr.mxu0 0.0
    %746 = vmatpush1.msra.mxu0 %v134
    %747 = vmatprep.subr.mxu0 0.0
    %748 = vmatpush1.msra.mxu0 %v135
    %749 = vmatprep.subr.mxu0 0.0
    %750 = vmatpush1.msra.mxu0 %v136
    %751 = vmatprep.subr.mxu0 0.0
    %752 = vmatpush1.msra.mxu0 %v137
    %753 = vmatprep.subr.mxu0 0.0
    %754 = vmatpush1.msra.mxu0 %v138
    %755 = vmatprep.subr.mxu0 0.0
    %756 = vmatpush1.msra.mxu0 %v139
    %757 = vmatprep.subr.mxu0 0.0
    %758 = vmatpush1.msra.mxu0 %v140
    %759 = vmatprep.subr.mxu0 0.0
    %760 = vmatpush1.msra.mxu0 %v141
    %761 = vmatprep.subr.mxu0 0.0
    %762 = vmatpush1.msra.mxu0 %v142
    %763 = vmatprep.subr.mxu0 0.0
    %764 = vmatpush1.msra.mxu0 %v143
    %765 = vmatprep.subr.mxu0 0.0
    %766 = vmatpush1.msra.mxu0 %v144
    %767 = vmatprep.subr.mxu0 0.0
    %768 = vmatpush1.msra.mxu0 %v145
    %769 = vmatprep.subr.mxu0 0.0
    %770 = vmatpush1.msra.mxu0 %v146
    %771 = vmatprep.subr.mxu0 0.0
    %772 = vmatpush1.msra.mxu0 %v147
    %773 = vmatprep.subr.mxu0 0.0
    %774 = vmatpush1.msra.mxu0 %v148
    %775 = vmatprep.subr.mxu0 0.0
    %776 = vmatpush1.msra.mxu0 %v149
    %777 = vmatprep.subr.mxu0 0.0
    %778 = vmatpush1.msra.mxu0 %v150
    %779 = vmatprep.subr.mxu0 0.0
    %780 = vmatpush1.msra.mxu0 %v151
    %781 = vmatprep.subr.mxu0 0.0
    %782 = vmatpush1.msra.mxu0 %v152
    %783 = vmatprep.subr.mxu0 0.0
    %784 = vmatpush1.msra.mxu0 %v153
    %785 = vmatprep.mubr.f32.mxu0 %v487
    %786 = vmatmul.mubr.f32.gmra.mrb[0].mxu0 %v479
    %v787 = vpop.f32.mrb[0].mxu0
    %v788 = vadd.f32 %v718, %v787
    %v789 = vpop.f32.mrb[0].mxu0
    %790 = vdwg.mxu0
    %791 = vmatprep.subr.mxu0 0.0
    %792 = vmatpush1.msra.mxu0 %v154
    %793 = vmatprep.subr.mxu0 0.0
    %794 = vmatpush1.msra.mxu0 %v155
    %795 = vmatprep.subr.mxu0 0.0
    %796 = vmatpush1.msra.mxu0 %v156
    %797 = vmatprep.subr.mxu0 0.0
    %798 = vmatpush1.msra.mxu0 %v157
    %799 = vmatprep.subr.mxu0 0.0
    %800 = vmatpush1.msra.mxu0 %v158
    %801 = vmatprep.subr.mxu0 0.0
    %802 = vmatpush1.msra.mxu0 %v159
    %803 = vmatprep.subr.mxu0 0.0
    %804 = vmatpush1.msra.mxu0 %v160
    %805 = vmatprep.subr.mxu0 0.0
    %806 = vmatpush1.msra.mxu0 %v161
    %807 = vmatprep.subr.mxu0 0.0
    %808 = vmatpush1.msra.mxu0 %v162
    %809 = vmatprep.subr.mxu0 0.0
    %810 = vmatpush1.msra.mxu0 %v163
    %811 = vmatprep.subr.mxu0 0.0
    %812 = vmatpush1.msra.mxu0 %v164
    %813 = vmatprep.subr.mxu0 0.0
    %814 = vmatpush1.msra.mxu0 %v165
    %815 = vmatprep.subr.mxu0 0.0
    %816 = vmatpush1.msra.mxu0 %v166
    %817 = vmatprep.subr.mxu0 0.0
    %818 = vmatpush1.msra.mxu0 %v167
    %819 = vmatprep.subr.mxu0 0.0
    %820 = vmatpush1.msra.mxu0 %v168
    %821 = vmatprep.subr.mxu0 0.0
    %822 = vmatpush1.msra.mxu0 %v169
    %823 = vmatprep.subr.mxu0 0.0
    %824 = vmatpush1.msra.mxu0 %v170
    %825 = vmatprep.subr.mxu0 0.0
    %826 = vmatpush1.msra.mxu0 %v171
    %827 = vmatprep.subr.mxu0 0.0
    %828 = vmatpush1.msra.mxu0 %v172
    %829 = vmatprep.subr.mxu0 0.0
    %830 = vmatpush1.msra.mxu0 %v173
    %831 = vmatprep.subr.mxu0 0.0
    %832 = vmatpush1.msra.mxu0 %v174
    %833 = vmatprep.subr.mxu0 0.0
    %834 = vmatpush1.msra.mxu0 %v175
    %835 = vmatprep.subr.mxu0 0.0
    %836 = vmatpush1.msra.mxu0 %v176
    %837 = vmatprep.subr.mxu0 0.0
    %838 = vmatpush1.msra.mxu0 %v177
    %839 = vmatprep.subr.mxu0 0.0
    %840 = vmatpush1.msra.mxu0 %v178
    %841 = vmatprep.subr.mxu0 0.0
    %842 = vmatpush1.msra.mxu0 %v179
    %843 = vmatprep.subr.mxu0 0.0
    %844 = vmatpush1.msra.mxu0 %v180
    %845 = vmatprep.subr.mxu0 0.0
    %846 = vmatpush1.msra.mxu0 %v181
    %847 = vmatprep.subr.mxu0 0.0
    %848 = vmatpush1.msra.mxu0 %v182
    %849 = vmatprep.subr.mxu0 0.0
    %850 = vmatpush1.msra.mxu0 %v183
    %851 = vmatprep.subr.mxu0 0.0
    %852 = vmatpush1.msra.mxu0 %v184
    %853 = vmatprep.subr.mxu0 0.0
    %854 = vmatpush1.msra.mxu0 %v185
    %855 = vmatprep.mubr.f32.mxu0 %v488
    %856 = vmatmul.mubr.f32.gmra.mrb[0].mxu0 %v486
    %v857 = vpop.f32.mrb[0].mxu0
    %v858 = vadd.f32 %v788, %v857
    %v859 = vpop.f32.mrb[0].mxu0
    %860 = vdwg.mxu0
    %861 = vmatprep.subr.mxu0 0.0
    %862 = vmatpush1.msra.mxu0 %v186
    %863 = vmatprep.subr.mxu0 0.0
    %864 = vmatpush1.msra.mxu0 %v187
    %865 = vmatprep.subr.mxu0 0.0
    %866 = vmatpush1.msra.mxu0 %v188
    %867 = vmatprep.subr.mxu0 0.0
    %868 = vmatpush1.msra.mxu0 %v189
    %869 = vmatprep.subr.mxu0 0.0
    %870 = vmatpush1.msra.mxu0 %v190
    %871 = vmatprep.subr.mxu0 0.0
    %872 = vmatpush1.msra.mxu0 %v191
    %873 = vmatprep.subr.mxu0 0.0
    %874 = vmatpush1.msra.mxu0 %v192
    %875 = vmatprep.subr.mxu0 0.0
    %876 = vmatpush1.msra.mxu0 %v193
    %877 = vmatprep.subr.mxu0 0.0
    %878 = vmatpush1.msra.mxu0 %v194
    %879 = vmatprep.subr.mxu0 0.0
    %880 = vmatpush1.msra.mxu0 %v195
    %881 = vmatprep.subr.mxu0 0.0
    %882 = vmatpush1.msra.mxu0 %v196
    %883 = vmatprep.subr.mxu0 0.0
    %884 = vmatpush1.msra.mxu0 %v197
    %885 = vmatprep.subr.mxu0 0.0
    %886 = vmatpush1.msra.mxu0 %v198
    %887 = vmatprep.subr.mxu0 0.0
    %888 = vmatpush1.msra.mxu0 %v199
    %889 = vmatprep.subr.mxu0 0.0
    %890 = vmatpush1.msra.mxu0 %v200
    %891 = vmatprep.subr.mxu0 0.0
    %892 = vmatpush1.msra.mxu0 %v201
    %893 = vmatprep.subr.mxu0 0.0
    %894 = vmatpush1.msra.mxu0 %v202
    %895 = vmatprep.subr.mxu0 0.0
    %896 = vmatpush1.msra.mxu0 %v203
    %897 = vmatprep.subr.mxu0 0.0
    %898 = vmatpush1.msra.mxu0 %v204
    %899 = vmatprep.subr.mxu0 0.0
    %900 = vmatpush1.msra.mxu0 %v205
    %901 = vmatprep.subr.mxu0 0.0
    %902 = vmatpush1.msra.mxu0 %v206
    %903 = vmatprep.subr.mxu0 0.0
    %904 = vmatpush1.msra.mxu0 %v207
    %905 = vmatprep.subr.mxu0 0.0
    %906 = vmatpush1.msra.mxu0 %v208
    %907 = vmatprep.subr.mxu0 0.0
    %908 = vmatpush1.msra.mxu0 %v209
    %909 = vmatprep.subr.mxu0 0.0
    %910 = vmatpush1.msra.mxu0 %v210
    %911 = vmatprep.subr.mxu0 0.0
    %912 = vmatpush1.msra.mxu0 %v211
    %913 = vmatprep.subr.mxu0 0.0
    %914 = vmatpush1.msra.mxu0 %v212
    %915 = vmatprep.subr.mxu0 0.0
    %916 = vmatpush1.msra.mxu0 %v213
    %917 = vmatprep.subr.mxu0 0.0
    %918 = vmatpush1.msra.mxu0 %v214
    %919 = vmatprep.subr.mxu0 0.0
    %920 = vmatpush1.msra.mxu0 %v215
    %921 = vmatprep.subr.mxu0 0.0
    %922 = vmatpush1.msra.mxu0 %v216
    %923 = vmatprep.subr.mxu0 0.0
    %924 = vmatpush1.msra.mxu0 %v217
    %925 = vmatprep.mubr.f32.mxu0 %v504
    %926 = vmatmul.mubr.f32.gmra.mrb[0].mxu0 %v496
    %v927 = vpop.f32.mrb[0].mxu0
    %v928 = vadd.f32 %v858, %v927
    %v929 = vpop.f32.mrb[0].mxu0
    %930 = vdwg.mxu0
    %931 = vmatprep.subr.mxu0 0.0
    %932 = vmatpush1.msra.mxu0 %v218
    %933 = vmatprep.subr.mxu0 0.0
    %934 = vmatpush1.msra.mxu0 %v219
    %935 = vmatprep.subr.mxu0 0.0
    %936 = vmatpush1.msra.mxu0 %v220
    %937 = vmatprep.subr.mxu0 0.0
    %938 = vmatpush1.msra.mxu0 %v221
    %939 = vmatprep.subr.mxu0 0.0
    %940 = vmatpush1.msra.mxu0 %v222
    %941 = vmatprep.subr.mxu0 0.0
    %942 = vmatpush1.msra.mxu0 %v223
    %943 = vmatprep.subr.mxu0 0.0
    %944 = vmatpush1.msra.mxu0 %v224
    %945 = vmatprep.subr.mxu0 0.0
    %946 = vmatpush1.msra.mxu0 %v225
    %947 = vmatprep.subr.mxu0 0.0
    %948 = vmatpush1.msra.mxu0 %v226
    %949 = vmatprep.subr.mxu0 0.0
    %950 = vmatpush1.msra.mxu0 %v227
    %951 = vmatprep.subr.mxu0 0.0
    %952 = vmatpush1.msra.mxu0 %v228
    %953 = vmatprep.subr.mxu0 0.0
    %954 = vmatpush1.msra.mxu0 %v229
    %955 = vmatprep.subr.mxu0 0.0
    %956 = vmatpush1.msra.mxu0 %v230
    %957 = vmatprep.subr.mxu0 0.0
    %958 = vmatpush1.msra.mxu0 %v231
    %959 = vmatprep.subr.mxu0 0.0
    %960 = vmatpush1.msra.mxu0 %v232
    %961 = vmatprep.subr.mxu0 0.0
    %962 = vmatpush1.msra.mxu0 %v233
    %963 = vmatprep.subr.mxu0 0.0
    %964 = vmatpush1.msra.mxu0 %v234
    %965 = vmatprep.subr.mxu0 0.0
    %966 = vmatpush1.msra.mxu0 %v235
    %967 = vmatprep.subr.mxu0 0.0
    %968 = vmatpush1.msra.mxu0 %v236
    %969 = vmatprep.subr.mxu0 0.0
    %970 = vmatpush1.msra.mxu0 %v237
    %971 = vmatprep.subr.mxu0 0.0
    %972 = vmatpush1.msra.mxu0 %v238
    %973 = vmatprep.subr.mxu0 0.0
    %974 = vmatpush1.msra.mxu0 %v239
    %975 = vmatprep.subr.mxu0 0.0
    %976 = vmatpush1.msra.mxu0 %v240
    %977 = vmatprep.subr.mxu0 0.0
    %978 = vmatpush1.msra.mxu0 %v241
    %979 = vmatprep.subr.mxu0 0.0
    %980 = vmatpush1.msra.mxu0 %v242
    %981 = vmatprep.subr.mxu0 0.0
    %982 = vmatpush1.msra.mxu0 %v243
    %983 = vmatprep.subr.mxu0 0.0
    %984 = vmatpush1.msra.mxu0 %v244
    %985 = vmatprep.subr.mxu0 0.0
    %986 = vmatpush1.msra.mxu0 %v245
    %987 = vmatprep.subr.mxu0 0.0
    %988 = vmatpush1.msra.mxu0 %v246
    %989 = vmatprep.subr.mxu0 0.0
    %990 = vmatpush1.msra.mxu0 %v247
    %991 = vmatprep.subr.mxu0 0.0
    %992 = vmatpush1.msra.mxu0 %v248
    %993 = vmatprep.subr.mxu0 0.0
    %994 = vmatpush1.msra.mxu0 %v249
    %995 = vmatprep.mubr.f32.mxu0 %v505
    %996 = vmatmul.mubr.f32.gmra.mrb[0].mxu0 %v503
    %v997 = vpop.f32.mrb[0].mxu0
    %v998 = vadd.f32 %v928, %v997
    %v999 = vpop.f32.mrb[0].mxu0
    %1000 = vdwg.mxu0
    %1001 = vmatprep.subr.mxu0 0.0
    %1002 = vmatpush1.msra.mxu0 %v250
    %1003 = vmatprep.subr.mxu0 0.0
    %1004 = vmatpush1.msra.mxu0 %v251
    %1005 = vmatprep.subr.mxu0 0.0
    %1006 = vmatpush1.msra.mxu0 %v252
    %1007 = vmatprep.subr.mxu0 0.0
    %1008 = vmatpush1.msra.mxu0 %v253
    %1009 = vmatprep.subr.mxu0 0.0
    %1010 = vmatpush1.msra.mxu0 %v254
    %1011 = vmatprep.subr.mxu0 0.0
    %1012 = vmatpush1.msra.mxu0 %v255
    %1013 = vmatprep.subr.mxu0 0.0
    %1014 = vmatpush1.msra.mxu0 %v256
    %1015 = vmatprep.subr.mxu0 0.0
    %1016 = vmatpush1.msra.mxu0 %v257
    %1017 = vmatprep.subr.mxu0 0.0
    %1018 = vmatpush1.msra.mxu0 %v258
    %1019 = vmatprep.subr.mxu0 0.0
    %1020 = vmatpush1.msra.mxu0 %v259
    %1021 = vmatprep.subr.mxu0 0.0
    %1022 = vmatpush1.msra.mxu0 %v260
    %1023 = vmatprep.subr.mxu0 0.0
    %1024 = vmatpush1.msra.mxu0 %v261
    %1025 = vmatprep.subr.mxu0 0.0
    %1026 = vmatpush1.msra.mxu0 %v262
    %1027 = vmatprep.subr.mxu0 0.0
    %1028 = vmatpush1.msra.mxu0 %v263
    %1029 = vmatprep.subr.mxu0 0.0
    %1030 = vmatpush1.msra.mxu0 %v264
    %1031 = vmatprep.subr.mxu0 0.0
    %1032 = vmatpush1.msra.mxu0 %v265
    %1033 = vmatprep.subr.mxu0 0.0
    %1034 = vmatpush1.msra.mxu0 %v266
    %1035 = vmatprep.subr.mxu0 0.0
    %1036 = vmatpush1.msra.mxu0 %v267
    %1037 = vmatprep.subr.mxu0 0.0
    %1038 = vmatpush1.msra.mxu0 %v268
    %1039 = vmatprep.subr.mxu0 0.0
    %1040 = vmatpush1.msra.mxu0 %v269
    %1041 = vmatprep.subr.mxu0 0.0
    %1042 = vmatpush1.msra.mxu0 %v270
    %1043 = vmatprep.subr.mxu0 0.0
    %1044 = vmatpush1.msra.mxu0 %v271
    %1045 = vmatprep.subr.mxu0 0.0
    %1046 = vmatpush1.msra.mxu0 %v272
    %1047 = vmatprep.subr.mxu0 0.0
    %1048 = vmatpush1.msra.mxu0 %v273
    %1049 = vmatprep.subr.mxu0 0.0
    %1050 = vmatpush1.msra.mxu0 %v274
    %1051 = vmatprep.subr.mxu0 0.0
    %1052 = vmatpush1.msra.mxu0 %v275
    %1053 = vmatprep.subr.mxu0 0.0
    %1054 = vmatpush1.msra.mxu0 %v276
    %1055 = vmatprep.subr.mxu0 0.0
    %1056 = vmatpush1.msra.mxu0 %v277
    %1057 = vmatprep.subr.mxu0 0.0
    %1058 = vmatpush1.msra.mxu0 %v278
    %1059 = vmatprep.subr.mxu0 0.0
    %1060 = vmatpush1.msra.mxu0 %v279
    %1061 = vmatprep.subr.mxu0 0.0
    %1062 = vmatpush1.msra.mxu0 %v280
    %1063 = vmatprep.subr.mxu0 0.0
    %1064 = vmatpush1.msra.mxu0 %v281
    %1065 = vmatprep.mubr.f32.mxu0 %v521
    %1066 = vmatmul.mubr.f32.gmra.mrb[0].mxu0 %v513
    %v1067 = vpop.f32.mrb[0].mxu0
    %v1068 = vadd.f32 %v998, %v1067
    %v1069 = vpop.f32.mrb[0].mxu0
    %1070 = vdwg.mxu0
    %1071 = vmatprep.subr.mxu0 0.0
    %1072 = vmatpush1.msra.mxu0 %v282
    %1073 = vmatprep.subr.mxu0 0.0
    %1074 = vmatpush1.msra.mxu0 %v283
    %1075 = vmatprep.subr.mxu0 0.0
    %1076 = vmatpush1.msra.mxu0 %v284
    %1077 = vmatprep.subr.mxu0 0.0
    %1078 = vmatpush1.msra.mxu0 %v285
    %1079 = vmatprep.subr.mxu0 0.0
    %1080 = vmatpush1.msra.mxu0 %v286
    %1081 = vmatprep.subr.mxu0 0.0
    %1082 = vmatpush1.msra.mxu0 %v287
    %1083 = vmatprep.subr.mxu0 0.0
    %1084 = vmatpush1.msra.mxu0 %v288
    %1085 = vmatprep.subr.mxu0 0.0
    %1086 = vmatpush1.msra.mxu0 %v289
    %1087 = vmatprep.subr.mxu0 0.0
    %1088 = vmatpush1.msra.mxu0 %v290
    %1089 = vmatprep.subr.mxu0 0.0
    %1090 = vmatpush1.msra.mxu0 %v291
    %1091 = vmatprep.subr.mxu0 0.0
    %1092 = vmatpush1.msra.mxu0 %v292
    %1093 = vmatprep.subr.mxu0 0.0
    %1094 = vmatpush1.msra.mxu0 %v293
    %1095 = vmatprep.subr.mxu0 0.0
    %1096 = vmatpush1.msra.mxu0 %v294
    %1097 = vmatprep.subr.mxu0 0.0
    %1098 = vmatpush1.msra.mxu0 %v295
    %1099 = vmatprep.subr.mxu0 0.0
    %1100 = vmatpush1.msra.mxu0 %v296
    %1101 = vmatprep.subr.mxu0 0.0
    %1102 = vmatpush1.msra.mxu0 %v297
    %1103 = vmatprep.subr.mxu0 0.0
    %1104 = vmatpush1.msra.mxu0 %v298
    %1105 = vmatprep.subr.mxu0 0.0
    %1106 = vmatpush1.msra.mxu0 %v299
    %1107 = vmatprep.subr.mxu0 0.0
    %1108 = vmatpush1.msra.mxu0 %v300
    %1109 = vmatprep.subr.mxu0 0.0
    %1110 = vmatpush1.msra.mxu0 %v301
    %1111 = vmatprep.subr.mxu0 0.0
    %1112 = vmatpush1.msra.mxu0 %v302
    %1113 = vmatprep.subr.mxu0 0.0
    %1114 = vmatpush1.msra.mxu0 %v303
    %1115 = vmatprep.subr.mxu0 0.0
    %1116 = vmatpush1.msra.mxu0 %v304
    %1117 = vmatprep.subr.mxu0 0.0
    %1118 = vmatpush1.msra.mxu0 %v305
    %1119 = vmatprep.subr.mxu0 0.0
    %1120 = vmatpush1.msra.mxu0 %v306
    %1121 = vmatprep.subr.mxu0 0.0
    %1122 = vmatpush1.msra.mxu0 %v307
    %1123 = vmatprep.subr.mxu0 0.0
    %1124 = vmatpush1.msra.mxu0 %v308
    %1125 = vmatprep.subr.mxu0 0.0
    %1126 = vmatpush1.msra.mxu0 %v309
    %1127 = vmatprep.subr.mxu0 0.0
    %1128 = vmatpush1.msra.mxu0 %v310
    %1129 = vmatprep.subr.mxu0 0.0
    %1130 = vmatpush1.msra.mxu0 %v311
    %1131 = vmatprep.subr.mxu0 0.0
    %1132 = vmatpush1.msra.mxu0 %v312
    %1133 = vmatprep.subr.mxu0 0.0
    %1134 = vmatpush1.msra.mxu0 %v313
    %1135 = vmatprep.mubr.f32.mxu0 %v522
    %1136 = vmatmul.mubr.f32.gmra.mrb[0].mxu0 %v520
    %v1137 = vpop.f32.mrb[0].mxu0
    %v1138 = vadd.f32 %v1068, %v1137
    %v1139 = vpop.f32.mrb[0].mxu0
    %1140 = vdwg.mxu0
    %1141 = vmatprep.subr.mxu0 0.0
    %1142 = vmatpush1.msra.mxu0 %v314
    %1143 = vmatprep.subr.mxu0 0.0
    %1144 = vmatpush1.msra.mxu0 %v315
    %1145 = vmatprep.subr.mxu0 0.0
    %1146 = vmatpush1.msra.mxu0 %v316
    %1147 = vmatprep.subr.mxu0 0.0
    %1148 = vmatpush1.msra.mxu0 %v317
    %1149 = vmatprep.subr.mxu0 0.0
    %1150 = vmatpush1.msra.mxu0 %v318
    %1151 = vmatprep.subr.mxu0 0.0
    %1152 = vmatpush1.msra.mxu0 %v319
    %1153 = vmatprep.subr.mxu0 0.0
    %1154 = vmatpush1.msra.mxu0 %v320
    %1155 = vmatprep.subr.mxu0 0.0
    %1156 = vmatpush1.msra.mxu0 %v321
    %1157 = vmatprep.subr.mxu0 0.0
    %1158 = vmatpush1.msra.mxu0 %v322
    %1159 = vmatprep.subr.mxu0 0.0
    %1160 = vmatpush1.msra.mxu0 %v323
    %1161 = vmatprep.subr.mxu0 0.0
    %1162 = vmatpush1.msra.mxu0 %v324
    %1163 = vmatprep.subr.mxu0 0.0
    %1164 = vmatpush1.msra.mxu0 %v325
    %1165 = vmatprep.subr.mxu0 0.0
    %1166 = vmatpush1.msra.mxu0 %v326
    %1167 = vmatprep.subr.mxu0 0.0
    %1168 = vmatpush1.msra.mxu0 %v327
    %1169 = vmatprep.subr.mxu0 0.0
    %1170 = vmatpush1.msra.mxu0 %v328
    %1171 = vmatprep.subr.mxu0 0.0
    %1172 = vmatpush1.msra.mxu0 %v329
    %1173 = vmatprep.subr.mxu0 0.0
    %1174 = vmatpush1.msra.mxu0 %v330
    %1175 = vmatprep.subr.mxu0 0.0
    %1176 = vmatpush1.msra.mxu0 %v331
    %1177 = vmatprep.subr.mxu0 0.0
    %1178 = vmatpush1.msra.mxu0 %v332
    %1179 = vmatprep.subr.mxu0 0.0
    %1180 = vmatpush1.msra.mxu0 %v333
    %1181 = vmatprep.subr.mxu0 0.0
    %1182 = vmatpush1.msra.mxu0 %v334
    %1183 = vmatprep.subr.mxu0 0.0
    %1184 = vmatpush1.msra.mxu0 %v335
    %1185 = vmatprep.subr.mxu0 0.0
    %1186 = vmatpush1.msra.mxu0 %v336
    %1187 = vmatprep.subr.mxu0 0.0
    %1188 = vmatpush1.msra.mxu0 %v337
    %1189 = vmatprep.subr.mxu0 0.0
    %1190 = vmatpush1.msra.mxu0 %v338
    %1191 = vmatprep.subr.mxu0 0.0
    %1192 = vmatpush1.msra.mxu0 %v339
    %1193 = vmatprep.subr.mxu0 0.0
    %1194 = vmatpush1.msra.mxu0 %v340
    %1195 = vmatprep.subr.mxu0 0.0
    %1196 = vmatpush1.msra.mxu0 %v341
    %1197 = vmatprep.subr.mxu0 0.0
    %1198 = vmatpush1.msra.mxu0 %v342
    %1199 = vmatprep.subr.mxu0 0.0
    %1200 = vmatpush1.msra.mxu0 %v343
    %1201 = vmatprep.subr.mxu0 0.0
    %1202 = vmatpush1.msra.mxu0 %v344
    %1203 = vmatprep.subr.mxu0 0.0
    %1204 = vmatpush1.msra.mxu0 %v345
    %1205 = vmatprep.mubr.f32.mxu0 %v538
    %1206 = vmatmul.mubr.f32.gmra.mrb[0].mxu0 %v530
    %v1207 = vpop.f32.mrb[0].mxu0
    %v1208 = vadd.f32 %v1138, %v1207
    %v1209 = vpop.f32.mrb[0].mxu0
    %1210 = vdwg.mxu0
    %1211 = vmatprep.subr.mxu0 0.0
    %1212 = vmatpush1.msra.mxu0 %v346
    %1213 = vmatprep.subr.mxu0 0.0
    %1214 = vmatpush1.msra.mxu0 %v347
    %1215 = vmatprep.subr.mxu0 0.0
    %1216 = vmatpush1.msra.mxu0 %v348
    %1217 = vmatprep.subr.mxu0 0.0
    %1218 = vmatpush1.msra.mxu0 %v349
    %1219 = vmatprep.subr.mxu0 0.0
    %1220 = vmatpush1.msra.mxu0 %v350
    %1221 = vmatprep.subr.mxu0 0.0
    %1222 = vmatpush1.msra.mxu0 %v351
    %1223 = vmatprep.subr.mxu0 0.0
    %1224 = vmatpush1.msra.mxu0 %v352
    %1225 = vmatprep.subr.mxu0 0.0
    %1226 = vmatpush1.msra.mxu0 %v353
    %1227 = vmatprep.subr.mxu0 0.0
    %1228 = vmatpush1.msra.mxu0 %v354
    %1229 = vmatprep.subr.mxu0 0.0
    %1230 = vmatpush1.msra.mxu0 %v355
    %1231 = vmatprep.subr.mxu0 0.0
    %1232 = vmatpush1.msra.mxu0 %v356
    %1233 = vmatprep.subr.mxu0 0.0
    %1234 = vmatpush1.msra.mxu0 %v357
    %1235 = vmatprep.subr.mxu0 0.0
    %1236 = vmatpush1.msra.mxu0 %v358
    %1237 = vmatprep.subr.mxu0 0.0
    %1238 = vmatpush1.msra.mxu0 %v359
    %1239 = vmatprep.subr.mxu0 0.0
    %1240 = vmatpush1.msra.mxu0 %v360
    %1241 = vmatprep.subr.mxu0 0.0
    %1242 = vmatpush1.msra.mxu0 %v361
    %1243 = vmatprep.subr.mxu0 0.0
    %1244 = vmatpush1.msra.mxu0 %v362
    %1245 = vmatprep.subr.mxu0 0.0
    %1246 = vmatpush1.msra.mxu0 %v363
    %1247 = vmatprep.subr.mxu0 0.0
    %1248 = vmatpush1.msra.mxu0 %v364
    %1249 = vmatprep.subr.mxu0 0.0
    %1250 = vmatpush1.msra.mxu0 %v365
    %1251 = vmatprep.subr.mxu0 0.0
    %1252 = vmatpush1.msra.mxu0 %v366
    %1253 = vmatprep.subr.mxu0 0.0
    %1254 = vmatpush1.msra.mxu0 %v367
    %1255 = vmatprep.subr.mxu0 0.0
    %1256 = vmatpush1.msra.mxu0 %v368
    %1257 = vmatprep.subr.mxu0 0.0
    %1258 = vmatpush1.msra.mxu0 %v369
    %1259 = vmatprep.subr.mxu0 0.0
    %1260 = vmatpush1.msra.mxu0 %v370
    %1261 = vmatprep.subr.mxu0 0.0
    %1262 = vmatpush1.msra.mxu0 %v371
    %1263 = vmatprep.subr.mxu0 0.0
    %1264 = vmatpush1.msra.mxu0 %v372
    %1265 = vmatprep.subr.mxu0 0.0
    %1266 = vmatpush1.msra.mxu0 %v373
    %1267 = vmatprep.subr.mxu0 0.0
    %1268 = vmatpush1.msra.mxu0 %v374
    %1269 = vmatprep.subr.mxu0 0.0
    %1270 = vmatpush1.msra.mxu0 %v375
    %1271 = vmatprep.subr.mxu0 0.0
    %1272 = vmatpush1.msra.mxu0 %v376
    %1273 = vmatprep.subr.mxu0 0.0
    %1274 = vmatpush1.msra.mxu0 %v377
    %1275 = vmatprep.mubr.f32.mxu0 %v539
    %1276 = vmatmul.mubr.f32.gmra.mrb[0].mxu0 %v537
    %v1277 = vpop.f32.mrb[0].mxu0
    %v1278 = vadd.f32 %v1208, %v1277
    %v1279 = vpop.f32.mrb[0].mxu0
    %1280 = vdwg.mxu0
    %1281 = vmatprep.subr.mxu0 0.0
    %1282 = vmatpush1.msra.mxu0 %v378
    %1283 = vmatprep.subr.mxu0 0.0
    %1284 = vmatpush1.msra.mxu0 %v379
    %1285 = vmatprep.subr.mxu0 0.0
    %1286 = vmatpush1.msra.mxu0 %v380
    %1287 = vmatprep.subr.mxu0 0.0
    %1288 = vmatpush1.msra.mxu0 %v381
    %1289 = vmatprep.subr.mxu0 0.0
    %1290 = vmatpush1.msra.mxu0 %v382
    %1291 = vmatprep.subr.mxu0 0.0
    %1292 = vmatpush1.msra.mxu0 %v383
    %1293 = vmatprep.subr.mxu0 0.0
    %1294 = vmatpush1.msra.mxu0 %v384
    %1295 = vmatprep.subr.mxu0 0.0
    %1296 = vmatpush1.msra.mxu0 %v385
    %1297 = vmatprep.subr.mxu0 0.0
    %1298 = vmatpush1.msra.mxu0 %v386
    %1299 = vmatprep.subr.mxu0 0.0
    %1300 = vmatpush1.msra.mxu0 %v387
    %1301 = vmatprep.subr.mxu0 0.0
    %1302 = vmatpush1.msra.mxu0 %v388
    %1303 = vmatprep.subr.mxu0 0.0
    %1304 = vmatpush1.msra.mxu0 %v389
    %1305 = vmatprep.subr.mxu0 0.0
    %1306 = vmatpush1.msra.mxu0 %v390
    %1307 = vmatprep.subr.mxu0 0.0
    %1308 = vmatpush1.msra.mxu0 %v391
    %1309 = vmatprep.subr.mxu0 0.0
    %1310 = vmatpush1.msra.mxu0 %v392
    %1311 = vmatprep.subr.mxu0 0.0
    %1312 = vmatpush1.msra.mxu0 %v393
    %1313 = vmatprep.subr.mxu0 0.0
    %1314 = vmatpush1.msra.mxu0 %v394
    %1315 = vmatprep.subr.mxu0 0.0
    %1316 = vmatpush1.msra.mxu0 %v395
    %1317 = vmatprep.subr.mxu0 0.0
    %1318 = vmatpush1.msra.mxu0 %v396
    %1319 = vmatprep.subr.mxu0 0.0
    %1320 = vmatpush1.msra.mxu0 %v397
    %1321 = vmatprep.subr.mxu0 0.0
    %1322 = vmatpush1.msra.mxu0 %v398
    %1323 = vmatprep.subr.mxu0 0.0
    %1324 = vmatpush1.msra.mxu0 %v399
    %1325 = vmatprep.subr.mxu0 0.0
    %1326 = vmatpush1.msra.mxu0 %v400
    %1327 = vmatprep.subr.mxu0 0.0
    %1328 = vmatpush1.msra.mxu0 %v401
    %1329 = vmatprep.subr.mxu0 0.0
    %1330 = vmatpush1.msra.mxu0 %v402
    %1331 = vmatprep.subr.mxu0 0.0
    %1332 = vmatpush1.msra.mxu0 %v403
    %1333 = vmatprep.subr.mxu0 0.0
    %1334 = vmatpush1.msra.mxu0 %v404
    %1335 = vmatprep.subr.mxu0 0.0
    %1336 = vmatpush1.msra.mxu0 %v405
    %1337 = vmatprep.subr.mxu0 0.0
    %1338 = vmatpush1.msra.mxu0 %v406
    %1339 = vmatprep.subr.mxu0 0.0
    %1340 = vmatpush1.msra.mxu0 %v407
    %1341 = vmatprep.subr.mxu0 0.0
    %1342 = vmatpush1.msra.mxu0 %v408
    %1343 = vmatprep.subr.mxu0 0.0
    %1344 = vmatpush1.msra.mxu0 %v409
    %1345 = vmatprep.mubr.f32.mxu0 %v555
    %1346 = vmatmul.mubr.f32.gmra.mrb[0].mxu0 %v547
    %v1347 = vpop.f32.mrb[0].mxu0
    %v1348 = vadd.f32 %v1278, %v1347
    %v1349 = vpop.f32.mrb[0].mxu0
    %1350 = vdwg.mxu0
    %1351 = vmatprep.subr.mxu0 0.0
    %1352 = vmatpush1.msra.mxu0 %v410
    %1353 = vmatprep.subr.mxu0 0.0
    %1354 = vmatpush1.msra.mxu0 %v411
    %1355 = vmatprep.subr.mxu0 0.0
    %1356 = vmatpush1.msra.mxu0 %v412
    %1357 = vmatprep.subr.mxu0 0.0
    %1358 = vmatpush1.msra.mxu0 %v413
    %1359 = vmatprep.subr.mxu0 0.0
    %1360 = vmatpush1.msra.mxu0 %v414
    %1361 = vmatprep.subr.mxu0 0.0
    %1362 = vmatpush1.msra.mxu0 %v415
    %1363 = vmatprep.subr.mxu0 0.0
    %1364 = vmatpush1.msra.mxu0 %v416
    %1365 = vmatprep.subr.mxu0 0.0
    %1366 = vmatpush1.msra.mxu0 %v417
    %1367 = vmatprep.subr.mxu0 0.0
    %1368 = vmatpush1.msra.mxu0 %v418
    %1369 = vmatprep.subr.mxu0 0.0
    %1370 = vmatpush1.msra.mxu0 %v419
    %1371 = vmatprep.subr.mxu0 0.0
    %1372 = vmatpush1.msra.mxu0 %v420
    %1373 = vmatprep.subr.mxu0 0.0
    %1374 = vmatpush1.msra.mxu0 %v421
    %1375 = vmatprep.subr.mxu0 0.0
    %1376 = vmatpush1.msra.mxu0 %v422
    %1377 = vmatprep.subr.mxu0 0.0
    %1378 = vmatpush1.msra.mxu0 %v423
    %1379 = vmatprep.subr.mxu0 0.0
    %1380 = vmatpush1.msra.mxu0 %v424
    %1381 = vmatprep.subr.mxu0 0.0
    %1382 = vmatpush1.msra.mxu0 %v425
    %1383 = vmatprep.subr.mxu0 0.0
    %1384 = vmatpush1.msra.mxu0 %v426
    %1385 = vmatprep.subr.mxu0 0.0
    %1386 = vmatpush1.msra.mxu0 %v427
    %1387 = vmatprep.subr.mxu0 0.0
    %1388 = vmatpush1.msra.mxu0 %v428
    %1389 = vmatprep.subr.mxu0 0.0
    %1390 = vmatpush1.msra.mxu0 %v429
    %1391 = vmatprep.subr.mxu0 0.0
    %1392 = vmatpush1.msra.mxu0 %v430
    %1393 = vmatprep.subr.mxu0 0.0
    %1394 = vmatpush1.msra.mxu0 %v431
    %1395 = vmatprep.subr.mxu0 0.0
    %1396 = vmatpush1.msra.mxu0 %v432
    %1397 = vmatprep.subr.mxu0 0.0
    %1398 = vmatpush1.msra.mxu0 %v433
    %1399 = vmatprep.subr.mxu0 0.0
    %1400 = vmatpush1.msra.mxu0 %v434
    %1401 = vmatprep.subr.mxu0 0.0
    %1402 = vmatpush1.msra.mxu0 %v435
    %1403 = vmatprep.subr.mxu0 0.0
    %1404 = vmatpush1.msra.mxu0 %v436
    %1405 = vmatprep.subr.mxu0 0.0
    %1406 = vmatpush1.msra.mxu0 %v437
    %1407 = vmatprep.subr.mxu0 0.0
    %1408 = vmatpush1.msra.mxu0 %v438
    %1409 = vmatprep.subr.mxu0 0.0
    %1410 = vmatpush1.msra.mxu0 %v439
    %1411 = vmatprep.subr.mxu0 0.0
    %1412 = vmatpush1.msra.mxu0 %v440
    %1413 = vmatprep.subr.mxu0 0.0
    %1414 = vmatpush1.msra.mxu0 %v441
    %1415 = vmatprep.mubr.f32.mxu0 %v556
    %1416 = vmatmul.mubr.f32.gmra.mrb[0].mxu0 %v554
    %v1417 = vpop.f32.mrb[0].mxu0
    %v1418 = vadd.f32 %v1348, %v1417
    %v1419 = vpop.f32.mrb[0].mxu0
    %1420 = vdwg.mxu0
    %1421 = vst [vmem:[#allocation8] sm:$0x3] %v1418
    // Predicated region
    $region26: #{tpu_custom_call.1} parent=1 // pred_check
      _
    $region27: #{tpu_custom_call.1} parent=1 // pred_check_branch
      %1423 = sbr.rel (0) target = $region29
    $region28: #{tpu_custom_call.1} parent=1 // pred_region
      %s1425 = ssub.s32 32, 32
      %1426 = vsyncadd [#allocation4], %s1425
      %s1428 = sshll.u32 [#allocation8], 4
      %s1429 = int_to_ptr.vmem [resolvable:$true] %s1428
      %1431 = dma.vmem_to_hbm [thread:$0]  %s1429, 32, %s3, [#allocation4]
    $region29: #{tpu_custom_call.1} parent=1 // pred_fallthru
      _
    // Predicated region
    $region30: #{tpu_custom_call.1} parent=1 // pred_check
      _
    $region31: #{tpu_custom_call.1} parent=1 // pred_check_branch
      %1433 = sbr.rel (0) target = $region33
    $region32: #{tpu_custom_call.1} parent=1 // pred_region
      %1434 = dma.done [#allocation4], 32
    $region33: #{tpu_custom_call.1} parent=1 // pred_fallthru
      _
    %1435 = vsyncpa [#allocation3], 1
    %1436 = vsyncpa [#allocation6], 1
    %1437 = vsyncpa [#allocation4], 1

</llo_original>
